<compile_context>
chip_gen: v7x
topology: tpu7x:2x2x1
jax: 0.10.0
libtpu: 0.0.40
codegen_flags: <defaults>
</compile_context>

<pallas_src>
import functools

import jax
import jax.numpy as jnp
from jax.experimental import pallas as pl
from jax.experimental.pallas import tpu as pltpu

DROPOUT_P = 0.1


# ---------------------------------------------------------------------------
# Fused kernel: full VAEClassifier forward (one batch tile per grid step)
# ---------------------------------------------------------------------------
def _vae_classifier_kernel(
    x_ref,
    w_enc_ref, b_enc_ref, m_enc_ref,
    w_mulv_ref, b_mulv_ref,
    eps_ref,
    w_zh_ref, b_zh_ref, m_dec_ref, m_cls_ref,
    w_dec2_ref, b_dec2_ref,
    w_cls2_ref, b_cls2_ref,
    recon_ref, logits_ref, mu_ref, logvar_ref,
    *, bottleneck_dim, hidden_dim,
):
    Z = bottleneck_dim
    H = hidden_dim

    def mm(a16, w_ref, b_ref):
        # bf16 weights straight from HBM (no in-kernel cast), f32 accumulation.
        return jnp.dot(a16, w_ref[...], preferred_element_type=jnp.float32) + b_ref[...]

    def silu(v):
        # sigmoid -> EUP slot, mul -> VPU; keep f32 (v5e has no bf16 VPU/EUP)
        return v * jax.nn.sigmoid(v)

    x16 = x_ref[...].astype(jnp.bfloat16)                               # (Bt, Din)

    # encoder: Linear -> SiLU -> Dropout (inverted-dropout mask, train mode)
    h = silu(mm(x16, w_enc_ref, b_enc_ref)) * m_enc_ref[...].astype(jnp.float32)
    h16 = h.astype(jnp.bfloat16)                                        # cast once, reuse

    # fused mu | logvar heads: one (Bt,H) x (H,2Z) MXU pass, split at lane Z
    mulv = mm(h16, w_mulv_ref, b_mulv_ref)                              # (Bt, 2Z)
    mu = mulv[:, :Z]
    logvar = mulv[:, Z:]
    mu_ref[...] = mu
    logvar_ref[...] = logvar

    # reparameterize: z = mu + eps * exp(0.5 * logvar)
    z = mu + eps_ref[...] * jnp.exp(0.5 * logvar)                       # (Bt, Z)
    z16 = z.astype(jnp.bfloat16)                                        # cast once, reuse

    # fused decoder-1 | classifier-1: one (Bt,Z) x (Z,2H) MXU pass, split at lane H
    dc = mm(z16, w_zh_ref, b_zh_ref)                                    # (Bt, 2H)
    d = silu(dc[:, :H]) * m_dec_ref[...].astype(jnp.float32)            # (Bt, H)
    c = silu(dc[:, H:]) * m_cls_ref[...].astype(jnp.float32)            # (Bt, H)

    recon_ref[...] = mm(d.astype(jnp.bfloat16), w_dec2_ref, b_dec2_ref)   # (Bt, Din)
    logits_ref[...] = mm(c.astype(jnp.bfloat16), w_cls2_ref, b_cls2_ref)  # (Bt, Cpad)


# ---------------------------------------------------------------------------
# Wrapper
# ---------------------------------------------------------------------------
@functools.partial(jax.jit, static_argnames=("num_classes",))
def vae_classifier_forward(x, params, eps, masks, *, num_classes):
    B, in_dim = x.shape
    hidden = params["w_enc"].shape[1]
    bott = params["w_mulv"].shape[1] // 2
    c_pad = params["w_cls2"].shape[1]

    # Batch tile: whole batch when small, else 128-row blocks (multiple of 8
    # sublanes).  Sized well under v7x's 64 MiB VMEM even with double-buffering.
    if B <= 128:
        bt = B
    else:
        assert B % 128 == 0, "large batches must be a multiple of 128"
        bt = 128
    grid = (B // bt,)

    def whole_spec(arr):
        # weights/biases: constant block index -> fetched once, reused across grid
        return pl.BlockSpec(arr.shape, lambda i: (0,) * arr.ndim)

    def batch_spec(arr):
        return pl.BlockSpec((bt, arr.shape[1]), lambda i: (i, 0))

    inputs = (
        x,
        params["w_enc"], params["b_enc"], masks["enc"],
        params["w_mulv"], params["b_mulv"],
        eps,
        params["w_zh"], params["b_zh"], masks["dec"], masks["cls"],
        params["w_dec2"], params["b_dec2"],
        params["w_cls2"], params["b_cls2"],
    )
    batched_idx = {0, 3, 6, 9, 10}   # x, m_enc, eps, m_dec, m_cls

    in_specs = [
        batch_spec(a) if idx in batched_idx else whole_spec(a)
        for idx, a in enumerate(inputs)
    ]

    out_shapes = (
        jax.ShapeDtypeStruct((B, in_dim), jnp.float32),   # recon
        jax.ShapeDtypeStruct((B, c_pad), jnp.float32),    # logits (lane-padded)
        jax.ShapeDtypeStruct((B, bott), jnp.float32),     # mu
        jax.ShapeDtypeStruct((B, bott), jnp.float32),     # logvar
    )
    out_specs = tuple(
        pl.BlockSpec((bt, s.shape[1]), lambda i: (i, 0)) for s in out_shapes
    )

    kernel = functools.partial(
        _vae_classifier_kernel, bottleneck_dim=bott, hidden_dim=hidden)

    recon, logits_pad, mu, logvar = pl.pallas_call(
        kernel,
        grid=grid,
        out_shape=out_shapes,
        in_specs=in_specs,
        out_specs=out_specs,
        compiler_params=pltpu.CompilerParams(dimension_semantics=("parallel",)),
    )(*inputs)

    # The padded->num_classes slice stays inside this jit; consumers that fuse
    # further should take logits_pad directly to avoid the extra tiny op.
    return recon, logits_pad[:, :num_classes], mu, logvar


# ---------------------------------------------------------------------------
# Parameter init (PyTorch nn.Linear-style uniform bounds).  Weights stored
# pre-transposed (in, out), PRE-FUSED (mu|logvar and dec1|cls1 concatenated),
# and cast to bf16 for HBM storage; biases stay f32.  Classifier output padded
# to 128 lanes with exact zeros.
# ---------------------------------------------------------------------------
def init_vae_classifier_params(key, input_dim, bottleneck_dim, hidden_dim,
                               num_classes, class_pad=128):
    def linear(k, in_dim, out_dim):
        kw, kb = jax.random.split(k)
        bound = in_dim ** -0.5
        w = jax.random.uniform(kw, (in_dim, out_dim), jnp.float32, -bound, bound)
        b = jax.random.uniform(kb, (1, out_dim), jnp.float32, -bound, bound)
        return w, b

    keys = jax.random.split(key, 7)
    w_enc, b_enc = linear(keys[0], input_dim, hidden_dim)
    w_mu, b_mu = linear(keys[1], hidden_dim, bottleneck_dim)
    w_lv, b_lv = linear(keys[2], hidden_dim, bottleneck_dim)
    w_d1, b_d1 = linear(keys[3], bottleneck_dim, hidden_dim)
    w_d2, b_d2 = linear(keys[4], hidden_dim, input_dim)
    w_c1, b_c1 = linear(keys[5], bottleneck_dim, hidden_dim)
    w_c2, b_c2 = linear(keys[6], hidden_dim, num_classes)

    cpad = max(class_pad, num_classes)
    w_c2 = jnp.pad(w_c2, ((0, 0), (0, cpad - num_classes)))
    b_c2 = jnp.pad(b_c2, ((0, 0), (0, cpad - num_classes)))

    bf16 = jnp.bfloat16
    return {
        "w_enc": w_enc.astype(bf16), "b_enc": b_enc,
        "w_mulv": jnp.concatenate([w_mu, w_lv], axis=1).astype(bf16),
        "b_mulv": jnp.concatenate([b_mu, b_lv], axis=1),
        "w_zh": jnp.concatenate([w_d1, w_c1], axis=1).astype(bf16),
        "b_zh": jnp.concatenate([b_d1, b_c1], axis=1),
        "w_dec2": w_d2.astype(bf16), "b_dec2": b_d2,
        "w_cls2": w_c2.astype(bf16), "b_cls2": b_c2,
    }


def make_dropout_masks(key, batch, hidden_dim, p=DROPOUT_P):
    keys = jax.random.split(key, 3)
    keep = 1.0 - p

    def mask(k):
        m = jax.random.bernoulli(k, keep, (batch, hidden_dim)).astype(jnp.float32) / keep
        return m.astype(jnp.bfloat16)   # 0 or 1/keep; bf16 halves mask DMA

    return {"enc": mask(keys[0]), "dec": mask(keys[1]), "cls": mask(keys[2])}


# ---------------------------------------------------------------------------
# Pure-JAX reference (same math, same bf16 weights/masks) for verification.
# ---------------------------------------------------------------------------
def reference_forward(x, params, eps, masks, num_classes):
    def mm(a, w, b):
        return jnp.dot(a.astype(jnp.bfloat16), w,
                       preferred_element_type=jnp.float32) + b

    def silu(v):
        return v * jax.nn.sigmoid(v)

    Z = params["w_mulv"].shape[1] // 2
    H = params["w_enc"].shape[1]

    h = silu(mm(x, params["w_enc"], params["b_enc"])) * masks["enc"].astype(jnp.float32)
    mulv = mm(h, params["w_mulv"], params["b_mulv"])
    mu, logvar = mulv[:, :Z], mulv[:, Z:]
    z = mu + eps * jnp.exp(0.5 * logvar)
    dc = mm(z, params["w_zh"], params["b_zh"])
    d = silu(dc[:, :H]) * masks["dec"].astype(jnp.float32)
    c = silu(dc[:, H:]) * masks["cls"].astype(jnp.float32)
    recon = mm(d, params["w_dec2"], params["b_dec2"])
    logits = mm(c, params["w_cls2"], params["b_cls2"])[:, :num_classes]
    return recon, logits, mu, logvar


if __name__ == "__main__":
    key = jax.random.PRNGKey(0)
    key, kx, kp, keps, kdrop = jax.random.split(key, 5)

    # small, lane-dense shapes consistent with the module
    B = 8
    input_dim = 128
    hidden_dim = 256
    bottleneck_dim = 128
    num_classes = 4

    x = jax.random.normal(kx, (B, input_dim), jnp.float32)
    params = init_vae_classifier_params(kp, input_dim, bottleneck_dim,
                                        hidden_dim, num_classes)
    eps = jax.random.normal(keps, (B, bottleneck_dim), jnp.float32)
    masks = make_dropout_masks(kdrop, B, hidden_dim)

    recon, logits, mu, logvar = vae_classifier_forward(
        x, params, eps, masks, num_classes=num_classes)
    recon, logits, mu, logvar = jax.block_until_ready((recon, logits, mu, logvar))

    r_recon, r_logits, r_mu, r_logvar = reference_forward(
        x, params, eps, masks, num_classes)

    assert recon.shape == (B, input_dim)
    assert logits.shape == (B, num_classes)
    assert mu.shape == (B, bottleneck_dim)
    assert logvar.shape == (B, bottleneck_dim)
    assert jnp.allclose(mu, r_mu, atol=2e-3, rtol=2e-3), "mu mismatch"
    assert jnp.allclose(logvar, r_logvar, atol=2e-3, rtol=2e-3), "logvar mismatch"
    assert jnp.allclose(recon, r_recon, atol=2e-3, rtol=2e-3), "recon mismatch"
    assert jnp.allclose(logits, r_logits, atol=2e-3, rtol=2e-3), "logits mismatch"

    print("KERNEL_OK")
</pallas_src>

<mosaic_0001>
module attributes {stable_mosaic.version = 11 : i64} {
  func.func @_vae_classifier_kernel(%arg0: i32, %arg1: memref<8x128xf32, #tpu.memory_space<vmem>>, %arg2: memref<128x256xbf16, #tpu.memory_space<vmem>>, %arg3: memref<1x256xf32, #tpu.memory_space<vmem>>, %arg4: memref<8x256xbf16, #tpu.memory_space<vmem>>, %arg5: memref<256x256xbf16, #tpu.memory_space<vmem>>, %arg6: memref<1x256xf32, #tpu.memory_space<vmem>>, %arg7: memref<8x128xf32, #tpu.memory_space<vmem>>, %arg8: memref<128x512xbf16, #tpu.memory_space<vmem>>, %arg9: memref<1x512xf32, #tpu.memory_space<vmem>>, %arg10: memref<8x256xbf16, #tpu.memory_space<vmem>>, %arg11: memref<8x256xbf16, #tpu.memory_space<vmem>>, %arg12: memref<256x128xbf16, #tpu.memory_space<vmem>>, %arg13: memref<1x128xf32, #tpu.memory_space<vmem>>, %arg14: memref<256x128xbf16, #tpu.memory_space<vmem>>, %arg15: memref<1x128xf32, #tpu.memory_space<vmem>>, %arg16: memref<8x128xf32, #tpu.memory_space<vmem>>, %arg17: memref<8x128xf32, #tpu.memory_space<vmem>>, %arg18: memref<8x128xf32, #tpu.memory_space<vmem>>, %arg19: memref<8x128xf32, #tpu.memory_space<vmem>>) attributes {dimension_semantics = [#tpu.dimension_semantics<parallel>], iteration_bounds = array<i64: 1>, scalar_prefetch = 0 : i64, scratch_operands = 0 : i64, tpu.core_type = #tpu.core_type<tc>, window_params = [{transform_indices = @transform_0, window_bounds = array<i64: 8, 128>}, {pipeline_mode = #tpu.pipeline_mode<synchronous>, transform_indices = @transform_1, window_bounds = array<i64: 128, 256>}, {pipeline_mode = #tpu.pipeline_mode<synchronous>, transform_indices = @transform_2, window_bounds = array<i64: 1, 256>}, {transform_indices = @transform_3, window_bounds = array<i64: 8, 256>}, {pipeline_mode = #tpu.pipeline_mode<synchronous>, transform_indices = @transform_4, window_bounds = array<i64: 256, 256>}, {pipeline_mode = #tpu.pipeline_mode<synchronous>, transform_indices = @transform_5, window_bounds = array<i64: 1, 256>}, {transform_indices = @transform_6, window_bounds = array<i64: 8, 128>}, {pipeline_mode = #tpu.pipeline_mode<synchronous>, transform_indices = @transform_7, window_bounds = array<i64: 128, 512>}, {pipeline_mode = #tpu.pipeline_mode<synchronous>, transform_indices = @transform_8, window_bounds = array<i64: 1, 512>}, {transform_indices = @transform_9, window_bounds = array<i64: 8, 256>}, {transform_indices = @transform_10, window_bounds = array<i64: 8, 256>}, {pipeline_mode = #tpu.pipeline_mode<synchronous>, transform_indices = @transform_11, window_bounds = array<i64: 256, 128>}, {pipeline_mode = #tpu.pipeline_mode<synchronous>, transform_indices = @transform_12, window_bounds = array<i64: 1, 128>}, {pipeline_mode = #tpu.pipeline_mode<synchronous>, transform_indices = @transform_13, window_bounds = array<i64: 256, 128>}, {pipeline_mode = #tpu.pipeline_mode<synchronous>, transform_indices = @transform_14, window_bounds = array<i64: 1, 128>}, {transform_indices = @transform_15, window_bounds = array<i64: 8, 128>}, {transform_indices = @transform_16, window_bounds = array<i64: 8, 128>}, {transform_indices = @transform_17, window_bounds = array<i64: 8, 128>}, {transform_indices = @transform_18, window_bounds = array<i64: 8, 128>}]} {
    %c0 = arith.constant 0 : index
    %c0_0 = arith.constant 0 : index
    %0 = vector.load %arg1[%c0, %c0_0] : memref<8x128xf32, #tpu.memory_space<vmem>>, vector<8x128xf32>
    %1 = arith.truncf %0 : vector<8x128xf32> to vector<8x128xbf16>
    %c0_1 = arith.constant 0 : index
    %c0_2 = arith.constant 0 : index
    %2 = vector.load %arg2[%c0_1, %c0_2] : memref<128x256xbf16, #tpu.memory_space<vmem>>, vector<128x256xbf16>
    %cst = arith.constant dense<0.000000e+00> : vector<8x256xf32>
    %3 = tpu.matmul %1, %2, %cst {dimension_numbers = #tpu.dot_dimension_numbers<[1], [0], [0], [1], [0, 0, 1, 1], [], []>} : vector<8x128xbf16>, vector<128x256xbf16>, vector<8x256xf32> -> vector<8x256xf32>
    %c0_3 = arith.constant 0 : index
    %c0_4 = arith.constant 0 : index
    %4 = vector.load %arg3[%c0_3, %c0_4] : memref<1x256xf32, #tpu.memory_space<vmem>>, vector<1x256xf32>
    %5 = vector.broadcast %4 : vector<1x256xf32> to vector<8x256xf32>
    %6 = arith.addf %3, %5 : vector<8x256xf32>
    %7 = arith.negf %6 : vector<8x256xf32>
    %8 = math.exp %7 : vector<8x256xf32>
    %cst_5 = arith.constant 1.000000e+00 : f32
    %9 = vector.broadcast %cst_5 : f32 to vector<8x256xf32>
    %10 = arith.addf %9, %8 : vector<8x256xf32>
    %11 = arith.divf %9, %10 : vector<8x256xf32>
    %12 = arith.mulf %6, %11 : vector<8x256xf32>
    %c0_6 = arith.constant 0 : index
    %c0_7 = arith.constant 0 : index
    %13 = vector.load %arg4[%c0_6, %c0_7] : memref<8x256xbf16, #tpu.memory_space<vmem>>, vector<8x256xbf16>
    %14 = arith.extf %13 : vector<8x256xbf16> to vector<8x256xf32>
    %15 = arith.mulf %12, %14 : vector<8x256xf32>
    %16 = arith.truncf %15 : vector<8x256xf32> to vector<8x256xbf16>
    %c0_8 = arith.constant 0 : index
    %c0_9 = arith.constant 0 : index
    %17 = vector.load %arg5[%c0_8, %c0_9] : memref<256x256xbf16, #tpu.memory_space<vmem>>, vector<256x256xbf16>
    %cst_10 = arith.constant dense<0.000000e+00> : vector<8x256xf32>
    %18 = tpu.matmul %16, %17, %cst_10 {dimension_numbers = #tpu.dot_dimension_numbers<[1], [0], [0], [1], [0, 0, 1, 1], [], []>} : vector<8x256xbf16>, vector<256x256xbf16>, vector<8x256xf32> -> vector<8x256xf32>
    %c0_11 = arith.constant 0 : index
    %c0_12 = arith.constant 0 : index
    %19 = vector.load %arg6[%c0_11, %c0_12] : memref<1x256xf32, #tpu.memory_space<vmem>>, vector<1x256xf32>
    %20 = vector.broadcast %19 : vector<1x256xf32> to vector<8x256xf32>
    %21 = arith.addf %18, %20 : vector<8x256xf32>
    %22 = vector.extract_strided_slice %21 {offsets = [0, 0], sizes = [8, 128], strides = [1, 1]} : vector<8x256xf32> to vector<8x128xf32>
    %23 = vector.extract_strided_slice %21 {offsets = [0, 128], sizes = [8, 128], strides = [1, 1]} : vector<8x256xf32> to vector<8x128xf32>
    %c0_13 = arith.constant 0 : index
    %c0_14 = arith.constant 0 : index
    %24 = vector.load %arg18[%c0_13, %c0_14] : memref<8x128xf32, #tpu.memory_space<vmem>>, vector<8x128xf32>
    tpu.vector_store %arg18[%c0_13, %c0_14], %22 {strides = array<i32>} : memref<8x128xf32, #tpu.memory_space<vmem>>, vector<8x128xf32>,
    %c0_15 = arith.constant 0 : index
    %c0_16 = arith.constant 0 : index
    %25 = vector.load %arg19[%c0_15, %c0_16] : memref<8x128xf32, #tpu.memory_space<vmem>>, vector<8x128xf32>
    tpu.vector_store %arg19[%c0_15, %c0_16], %23 {strides = array<i32>} : memref<8x128xf32, #tpu.memory_space<vmem>>, vector<8x128xf32>,
    %c0_17 = arith.constant 0 : index
    %c0_18 = arith.constant 0 : index
    %26 = vector.load %arg7[%c0_17, %c0_18] : memref<8x128xf32, #tpu.memory_space<vmem>>, vector<8x128xf32>
    %cst_19 = arith.constant 5.000000e-01 : f32
    %27 = vector.broadcast %cst_19 : f32 to vector<8x128xf32>
    %28 = arith.mulf %27, %23 : vector<8x128xf32>
    %29 = math.exp %28 : vector<8x128xf32>
    %30 = arith.mulf %26, %29 : vector<8x128xf32>
    %31 = arith.addf %22, %30 : vector<8x128xf32>
    %32 = arith.truncf %31 : vector<8x128xf32> to vector<8x128xbf16>
    %c0_20 = arith.constant 0 : index
    %c0_21 = arith.constant 0 : index
    %33 = vector.load %arg8[%c0_20, %c0_21] : memref<128x512xbf16, #tpu.memory_space<vmem>>, vector<128x512xbf16>
    %cst_22 = arith.constant dense<0.000000e+00> : vector<8x512xf32>
    %34 = tpu.matmul %32, %33, %cst_22 {dimension_numbers = #tpu.dot_dimension_numbers<[1], [0], [0], [1], [0, 0, 1, 1], [], []>} : vector<8x128xbf16>, vector<128x512xbf16>, vector<8x512xf32> -> vector<8x512xf32>
    %c0_23 = arith.constant 0 : index
    %c0_24 = arith.constant 0 : index
    %35 = vector.load %arg9[%c0_23, %c0_24] : memref<1x512xf32, #tpu.memory_space<vmem>>, vector<1x512xf32>
    %36 = vector.broadcast %35 : vector<1x512xf32> to vector<8x512xf32>
    %37 = arith.addf %34, %36 : vector<8x512xf32>
    %38 = vector.extract_strided_slice %37 {offsets = [0, 0], sizes = [8, 256], strides = [1, 1]} : vector<8x512xf32> to vector<8x256xf32>
    %39 = arith.negf %38 : vector<8x256xf32>
    %40 = math.exp %39 : vector<8x256xf32>
    %cst_25 = arith.constant 1.000000e+00 : f32
    %41 = vector.broadcast %cst_25 : f32 to vector<8x256xf32>
    %42 = arith.addf %41, %40 : vector<8x256xf32>
    %43 = arith.divf %41, %42 : vector<8x256xf32>
    %44 = arith.mulf %38, %43 : vector<8x256xf32>
    %c0_26 = arith.constant 0 : index
    %c0_27 = arith.constant 0 : index
    %45 = vector.load %arg10[%c0_26, %c0_27] : memref<8x256xbf16, #tpu.memory_space<vmem>>, vector<8x256xbf16>
    %46 = arith.extf %45 : vector<8x256xbf16> to vector<8x256xf32>
    %47 = arith.mulf %44, %46 : vector<8x256xf32>
    %48 = vector.extract_strided_slice %37 {offsets = [0, 256], sizes = [8, 256], strides = [1, 1]} : vector<8x512xf32> to vector<8x256xf32>
    %49 = arith.negf %48 : vector<8x256xf32>
    %50 = math.exp %49 : vector<8x256xf32>
    %cst_28 = arith.constant 1.000000e+00 : f32
    %51 = vector.broadcast %cst_28 : f32 to vector<8x256xf32>
    %52 = arith.addf %51, %50 : vector<8x256xf32>
    %53 = arith.divf %51, %52 : vector<8x256xf32>
    %54 = arith.mulf %48, %53 : vector<8x256xf32>
    %c0_29 = arith.constant 0 : index
    %c0_30 = arith.constant 0 : index
    %55 = vector.load %arg11[%c0_29, %c0_30] : memref<8x256xbf16, #tpu.memory_space<vmem>>, vector<8x256xbf16>
    %56 = arith.extf %55 : vector<8x256xbf16> to vector<8x256xf32>
    %57 = arith.mulf %54, %56 : vector<8x256xf32>
    %58 = arith.truncf %47 : vector<8x256xf32> to vector<8x256xbf16>
    %c0_31 = arith.constant 0 : index
    %c0_32 = arith.constant 0 : index
    %59 = vector.load %arg12[%c0_31, %c0_32] : memref<256x128xbf16, #tpu.memory_space<vmem>>, vector<256x128xbf16>
    %cst_33 = arith.constant dense<0.000000e+00> : vector<8x128xf32>
    %60 = tpu.matmul %58, %59, %cst_33 {dimension_numbers = #tpu.dot_dimension_numbers<[1], [0], [0], [1], [0, 0, 1, 1], [], []>} : vector<8x256xbf16>, vector<256x128xbf16>, vector<8x128xf32> -> vector<8x128xf32>
    %c0_34 = arith.constant 0 : index
    %c0_35 = arith.constant 0 : index
    %61 = vector.load %arg13[%c0_34, %c0_35] : memref<1x128xf32, #tpu.memory_space<vmem>>, vector<1x128xf32>
    %62 = vector.broadcast %61 : vector<1x128xf32> to vector<8x128xf32>
    %63 = arith.addf %60, %62 : vector<8x128xf32>
    %c0_36 = arith.constant 0 : index
    %c0_37 = arith.constant 0 : index
    %64 = vector.load %arg16[%c0_36, %c0_37] : memref<8x128xf32, #tpu.memory_space<vmem>>, vector<8x128xf32>
    tpu.vector_store %arg16[%c0_36, %c0_37], %63 {strides = array<i32>} : memref<8x128xf32, #tpu.memory_space<vmem>>, vector<8x128xf32>,
    %65 = arith.truncf %57 : vector<8x256xf32> to vector<8x256xbf16>
    %c0_38 = arith.constant 0 : index
    %c0_39 = arith.constant 0 : index
    %66 = vector.load %arg14[%c0_38, %c0_39] : memref<256x128xbf16, #tpu.memory_space<vmem>>, vector<256x128xbf16>
    %cst_40 = arith.constant dense<0.000000e+00> : vector<8x128xf32>
    %67 = tpu.matmul %65, %66, %cst_40 {dimension_numbers = #tpu.dot_dimension_numbers<[1], [0], [0], [1], [0, 0, 1, 1], [], []>} : vector<8x256xbf16>, vector<256x128xbf16>, vector<8x128xf32> -> vector<8x128xf32>
    %c0_41 = arith.constant 0 : index
    %c0_42 = arith.constant 0 : index
    %68 = vector.load %arg15[%c0_41, %c0_42] : memref<1x128xf32, #tpu.memory_space<vmem>>, vector<1x128xf32>
    %69 = vector.broadcast %68 : vector<1x128xf32> to vector<8x128xf32>
    %70 = arith.addf %67, %69 : vector<8x128xf32>
    %c0_43 = arith.constant 0 : index
    %c0_44 = arith.constant 0 : index
    %71 = vector.load %arg17[%c0_43, %c0_44] : memref<8x128xf32, #tpu.memory_space<vmem>>, vector<8x128xf32>
    tpu.vector_store %arg17[%c0_43, %c0_44], %70 {strides = array<i32>} : memref<8x128xf32, #tpu.memory_space<vmem>>, vector<8x128xf32>,
    return
  }
  func.func @transform_0(%arg0: i32) -> (i32, i32) {
    %c0_i32 = arith.constant 0 : i32
    %c0_i32_0 = arith.constant 0 : i32
    return %arg0, %c0_i32 : i32, i32
  }
  func.func @transform_1(%arg0: i32) -> (i32, i32) {
    %c0_i32 = arith.constant 0 : i32
    %c0_i32_0 = arith.constant 0 : i32
    %c0_i32_1 = arith.constant 0 : i32
    return %c0_i32, %c0_i32_0 : i32, i32
  }
  func.func @transform_2(%arg0: i32) -> (i32, i32) {
    %c0_i32 = arith.constant 0 : i32
    %c0_i32_0 = arith.constant 0 : i32
    %c0_i32_1 = arith.constant 0 : i32
    return %c0_i32, %c0_i32_0 : i32, i32
  }
  func.func @transform_3(%arg0: i32) -> (i32, i32) {
    %c0_i32 = arith.constant 0 : i32
    %c0_i32_0 = arith.constant 0 : i32
    return %arg0, %c0_i32 : i32, i32
  }
  func.func @transform_4(%arg0: i32) -> (i32, i32) {
    %c0_i32 = arith.constant 0 : i32
    %c0_i32_0 = arith.constant 0 : i32
    %c0_i32_1 = arith.constant 0 : i32
    return %c0_i32, %c0_i32_0 : i32, i32
  }
  func.func @transform_5(%arg0: i32) -> (i32, i32) {
    %c0_i32 = arith.constant 0 : i32
    %c0_i32_0 = arith.constant 0 : i32
    %c0_i32_1 = arith.constant 0 : i32
    return %c0_i32, %c0_i32_0 : i32, i32
  }
  func.func @transform_6(%arg0: i32) -> (i32, i32) {
    %c0_i32 = arith.constant 0 : i32
    %c0_i32_0 = arith.constant 0 : i32
    return %arg0, %c0_i32 : i32, i32
  }
  func.func @transform_7(%arg0: i32) -> (i32, i32) {
    %c0_i32 = arith.constant 0 : i32
    %c0_i32_0 = arith.constant 0 : i32
    %c0_i32_1 = arith.constant 0 : i32
    return %c0_i32, %c0_i32_0 : i32, i32
  }
  func.func @transform_8(%arg0: i32) -> (i32, i32) {
    %c0_i32 = arith.constant 0 : i32
    %c0_i32_0 = arith.constant 0 : i32
    %c0_i32_1 = arith.constant 0 : i32
    return %c0_i32, %c0_i32_0 : i32, i32
  }
  func.func @transform_9(%arg0: i32) -> (i32, i32) {
    %c0_i32 = arith.constant 0 : i32
    %c0_i32_0 = arith.constant 0 : i32
    return %arg0, %c0_i32 : i32, i32
  }
  func.func @transform_10(%arg0: i32) -> (i32, i32) {
    %c0_i32 = arith.constant 0 : i32
    %c0_i32_0 = arith.constant 0 : i32
    return %arg0, %c0_i32 : i32, i32
  }
  func.func @transform_11(%arg0: i32) -> (i32, i32) {
    %c0_i32 = arith.constant 0 : i32
    %c0_i32_0 = arith.constant 0 : i32
    %c0_i32_1 = arith.constant 0 : i32
    return %c0_i32, %c0_i32_0 : i32, i32
  }
  func.func @transform_12(%arg0: i32) -> (i32, i32) {
    %c0_i32 = arith.constant 0 : i32
    %c0_i32_0 = arith.constant 0 : i32
    %c0_i32_1 = arith.constant 0 : i32
    return %c0_i32, %c0_i32_0 : i32, i32
  }
  func.func @transform_13(%arg0: i32) -> (i32, i32) {
    %c0_i32 = arith.constant 0 : i32
    %c0_i32_0 = arith.constant 0 : i32
    %c0_i32_1 = arith.constant 0 : i32
    return %c0_i32, %c0_i32_0 : i32, i32
  }
  func.func @transform_14(%arg0: i32) -> (i32, i32) {
    %c0_i32 = arith.constant 0 : i32
    %c0_i32_0 = arith.constant 0 : i32
    %c0_i32_1 = arith.constant 0 : i32
    return %c0_i32, %c0_i32_0 : i32, i32
  }
  func.func @transform_15(%arg0: i32) -> (i32, i32) {
    %c0_i32 = arith.constant 0 : i32
    %c0_i32_0 = arith.constant 0 : i32
    return %arg0, %c0_i32 : i32, i32
  }
  func.func @transform_16(%arg0: i32) -> (i32, i32) {
    %c0_i32 = arith.constant 0 : i32
    %c0_i32_0 = arith.constant 0 : i32
    return %arg0, %c0_i32 : i32, i32
  }
  func.func @transform_17(%arg0: i32) -> (i32, i32) {
    %c0_i32 = arith.constant 0 : i32
    %c0_i32_0 = arith.constant 0 : i32
    return %arg0, %c0_i32 : i32, i32
  }
  func.func @transform_18(%arg0: i32) -> (i32, i32) {
    %c0_i32 = arith.constant 0 : i32
    %c0_i32_0 = arith.constant 0 : i32
    return %arg0, %c0_i32 : i32, i32
  }
}

</mosaic_0001>

<llo_original>
// kernel: vae_classifier_forward.1
$region0: #{vae_classifier_forward.1}
  #allocation0 [shape = 'u32[]', space=smem, size = 0x4, offset = 0x4, fixed_abs, tag = 'smem constant byte address 0x4 - core index']
  #allocation1 [shape = 'u32[144,128]{1,0:T(1,128)}', space=vmem, size = 0x12000, scoped, tag = 'internal scratch']
  %s0 = inlined_call_operand.hbm [shape: f32[8,128], index: 0, kind: input, shape index: {}]
  %s1 = inlined_call_operand.hbm [shape: bf16[128,256], index: 1, kind: input, shape index: {}]
  %s2 = inlined_call_operand.vmem [shape: f32[1,256], index: 2, kind: input, shape index: {}]
  %s3 = inlined_call_operand.vmem [shape: bf16[8,256], index: 3, kind: input, shape index: {}]
  %s4 = inlined_call_operand.hbm [shape: bf16[256,256], index: 4, kind: input, shape index: {}]
  %s5 = inlined_call_operand.hbm [shape: f32[1,256], index: 5, kind: input, shape index: {}]
  %s6 = inlined_call_operand.vmem [shape: f32[8,128], index: 6, kind: input, shape index: {}]
  %s7 = inlined_call_operand.hbm [shape: bf16[128,512], index: 7, kind: input, shape index: {}]
  %s8 = inlined_call_operand.hbm [shape: f32[1,512], index: 8, kind: input, shape index: {}]
  %s9 = inlined_call_operand.vmem [shape: bf16[8,256], index: 9, kind: input, shape index: {}]
  %s10 = inlined_call_operand.vmem [shape: bf16[8,256], index: 10, kind: input, shape index: {}]
  %s11 = inlined_call_operand.hbm [shape: bf16[256,128], index: 11, kind: input, shape index: {}]
  %s12 = inlined_call_operand.hbm [shape: f32[1,128], index: 12, kind: input, shape index: {}]
  %s13 = inlined_call_operand.hbm [shape: bf16[256,128], index: 13, kind: input, shape index: {}]
  %s14 = inlined_call_operand.hbm [shape: f32[1,128], index: 14, kind: input, shape index: {}]
  %s15 = inlined_call_operand.hbm [shape: f32[8,128], index: 15, kind: output, shape index: {0}]
  %s16 = inlined_call_operand.vmem [shape: f32[8,128], index: 16, kind: output, shape index: {1}]
  %s17 = inlined_call_operand.hbm [shape: f32[8,128], index: 17, kind: output, shape index: {2}]
  %s18 = inlined_call_operand.hbm [shape: f32[8,128], index: 18, kind: output, shape index: {3}]
  %19 = xla_tuple %s15, %s16, %s17, %s18
  %s20 = sld [smem:[#allocation0]]
  $region134: #{vae_classifier_forward.1} parent=0
    _
  %s22 = ssub.s32 1, %s20
  %s23 = scalar_select 0, %s22, %s20
  $region1: #{vae_classifier_forward.1} parent=0
    #allocation2 [shape = 'u8[4096]{0}', space=vmem, size = 0x1000, scoped, tag = 'input window, operand 0, single buffered']
    #allocation3 [shape = 's32[1]{0}', space=sflag, size = 0x4, scoped, tag = 'scoped memory for vae_classifier_forward.1']
    #allocation4 [shape = 's32[1]{0}', space=sflag, size = 0x4, scoped, tag = 'scoped memory for vae_classifier_forward.1']
    #allocation5 [shape = 'u8[65536]{0}', space=vmem, size = 0x10000, scoped, tag = 'input window, operand 1, single buffered']
    #allocation6 [shape = 's32[1]{0}', space=sflag, size = 0x4, scoped, tag = 'scoped memory for vae_classifier_forward.1']
    #allocation7 [shape = 'u8[131072]{0}', space=vmem, size = 0x20000, scoped, tag = 'input window, operand 4, single buffered']
    #allocation8 [shape = 'u8[1024]{0}', space=vmem, size = 0x400, scoped, tag = 'input window, operand 5, single buffered']
    #allocation9 [shape = 's32[1]{0}', space=sflag, size = 0x4, scoped, tag = 'scoped memory for vae_classifier_forward.1']
    #allocation10 [shape = 'u8[131072]{0}', space=vmem, size = 0x20000, scoped, tag = 'input window, operand 7, single buffered']
    #allocation11 [shape = 'u8[2048]{0}', space=vmem, size = 0x800, scoped, tag = 'input window, operand 8, single buffered']
    #allocation12 [shape = 's32[1]{0}', space=sflag, size = 0x4, scoped, tag = 'scoped memory for vae_classifier_forward.1']
    #allocation13 [shape = 'u8[65536]{0}', space=vmem, size = 0x10000, scoped, tag = 'input window, operand 11, single buffered']
    #allocation14 [shape = 'u8[512]{0}', space=vmem, size = 0x400, scoped, tag = 'input window, operand 12, single buffered']
    #allocation15 [shape = 's32[1]{0}', space=sflag, size = 0x4, scoped, tag = 'scoped memory for vae_classifier_forward.1']
    #allocation16 [shape = 'u8[65536]{0}', space=vmem, size = 0x10000, scoped, tag = 'input window, operand 13, single buffered']
    #allocation17 [shape = 'u8[512]{0}', space=vmem, size = 0x400, scoped, tag = 'input window, operand 14, single buffered']
    #allocation18 [shape = 's32[1]{0}', space=sflag, size = 0x4, scoped, tag = 'scoped memory for vae_classifier_forward.1']
    #allocation19 [shape = 'u8[4096]{0}', space=vmem, size = 0x1000, scoped, tag = 'output window, operand 0, single buffered']
    #allocation20 [shape = 'u8[4096]{0}', space=vmem, size = 0x1000, scoped, tag = 'output window, operand 2, single buffered']
    #allocation21 [shape = 's32[1]{0}', space=sflag, size = 0x4, scoped, tag = 'scoped memory for vae_classifier_forward.1']
    #allocation22 [shape = 'u8[4096]{0}', space=vmem, size = 0x1000, scoped, tag = 'output window, operand 3, single buffered']
    %24 = vsyncpa [#allocation3], 0
    %25 = vsyncpa [#allocation6], 0
    %26 = vsyncpa [#allocation9], 0
    %27 = vsyncpa [#allocation12], 0
    %28 = vsyncpa [#allocation15], 0
    %29 = vsyncpa [#allocation18], 0
    %30 = vsyncpa [#allocation4], 0
    %31 = vsyncpa [#allocation21], 0
    // Predicated region
    $region2: #{vae_classifier_forward.1} parent=1 // pred_check
      _
    $region3: #{vae_classifier_forward.1} parent=1 // pred_check_branch
      %33 = sbr.rel (0) target = $region5
    $region4: #{vae_classifier_forward.1} parent=1 // pred_region
      %s35 = ssub.s32 128, 128
      %36 = vsyncadd [#allocation3], %s35
      %s38 = sshll.u32 [#allocation2], 4
      %s39 = int_to_ptr.vmem [resolvable:$true] %s38
      %41 = dma.hbm_to_vmem [thread:$0]  %s0, 128, %s39, [#allocation3]
    $region5: #{vae_classifier_forward.1} parent=1 // pred_fallthru
      _
    // Predicated region
    $region6: #{vae_classifier_forward.1} parent=1 // pred_check
      _
    $region7: #{vae_classifier_forward.1} parent=1 // pred_check_branch
      %43 = sbr.rel (0) target = $region9
    $region8: #{vae_classifier_forward.1} parent=1 // pred_region
      %s45 = ssub.s32 2048, 2048
      %46 = vsyncadd [#allocation6], %s45
      %s47 = sshll.u32 [#allocation5], 4
      %s48 = int_to_ptr.vmem [resolvable:$true] %s47
      %53 = dma.hbm_to_vmem [thread:$0]  %s1, 2048, %s48, [#allocation6], 128, 128, 8
    $region9: #{vae_classifier_forward.1} parent=1 // pred_fallthru
      _
    // Predicated region
    $region10: #{vae_classifier_forward.1} parent=1 // pred_check
      _
    $region11: #{vae_classifier_forward.1} parent=1 // pred_check_branch
      %55 = sbr.rel (0) target = $region13
    $region12: #{vae_classifier_forward.1} parent=1 // pred_region
      _
    $region13: #{vae_classifier_forward.1} parent=1 // pred_fallthru
      _
    // Predicated region
    $region14: #{vae_classifier_forward.1} parent=1 // pred_check
      _
    $region15: #{vae_classifier_forward.1} parent=1 // pred_check_branch
      %57 = sbr.rel (0) target = $region17
    $region16: #{vae_classifier_forward.1} parent=1 // pred_region
      _
    $region17: #{vae_classifier_forward.1} parent=1 // pred_fallthru
      _
    // Predicated region
    $region18: #{vae_classifier_forward.1} parent=1 // pred_check
      _
    $region19: #{vae_classifier_forward.1} parent=1 // pred_check_branch
      %59 = sbr.rel (0) target = $region21
    $region20: #{vae_classifier_forward.1} parent=1 // pred_region
      %s61 = ssub.s32 4096, 4096
      %62 = vsyncadd [#allocation6], %s61
      %s63 = sshll.u32 [#allocation7], 4
      %s64 = int_to_ptr.vmem [resolvable:$true] %s63
      %69 = dma.hbm_to_vmem [thread:$0]  %s4, 4096, %s64, [#allocation6], 128, 128, 8
    $region21: #{vae_classifier_forward.1} parent=1 // pred_fallthru
      _
    // Predicated region
    $region22: #{vae_classifier_forward.1} parent=1 // pred_check
      _
    $region23: #{vae_classifier_forward.1} parent=1 // pred_check_branch
      %71 = sbr.rel (0) target = $region25
    $region24: #{vae_classifier_forward.1} parent=1 // pred_region
      %s73 = ssub.s32 32, 32
      %74 = vsyncadd [#allocation9], %s73
      %s76 = sshll.u32 [#allocation8], 4
      %s77 = int_to_ptr.vmem [resolvable:$true] %s76
      %79 = dma.hbm_to_vmem [thread:$0]  %s5, 32, %s77, [#allocation9]
    $region25: #{vae_classifier_forward.1} parent=1 // pred_fallthru
      _
    // Predicated region
    $region26: #{vae_classifier_forward.1} parent=1 // pred_check
      _
    $region27: #{vae_classifier_forward.1} parent=1 // pred_check_branch
      %81 = sbr.rel (0) target = $region29
    $region28: #{vae_classifier_forward.1} parent=1 // pred_region
      _
    $region29: #{vae_classifier_forward.1} parent=1 // pred_fallthru
      _
    // Predicated region
    $region30: #{vae_classifier_forward.1} parent=1 // pred_check
      _
    $region31: #{vae_classifier_forward.1} parent=1 // pred_check_branch
      %83 = sbr.rel (0) target = $region33
    $region32: #{vae_classifier_forward.1} parent=1 // pred_region
      %s85 = ssub.s32 4096, 4096
      %86 = vsyncadd [#allocation9], %s85
      %s87 = sshll.u32 [#allocation10], 4
      %s88 = int_to_ptr.vmem [resolvable:$true] %s87
      %93 = dma.hbm_to_vmem [thread:$0]  %s7, 4096, %s88, [#allocation9], 256, 256, 16
    $region33: #{vae_classifier_forward.1} parent=1 // pred_fallthru
      _
    // Predicated region
    $region34: #{vae_classifier_forward.1} parent=1 // pred_check
      _
    $region35: #{vae_classifier_forward.1} parent=1 // pred_check_branch
      %95 = sbr.rel (0) target = $region37
    $region36: #{vae_classifier_forward.1} parent=1 // pred_region
      %s97 = ssub.s32 64, 64
      %98 = vsyncadd [#allocation12], %s97
      %s100 = sshll.u32 [#allocation11], 4
      %s101 = int_to_ptr.vmem [resolvable:$true] %s100
      %103 = dma.hbm_to_vmem [thread:$0]  %s8, 64, %s101, [#allocation12]
    $region37: #{vae_classifier_forward.1} parent=1 // pred_fallthru
      _
    // Predicated region
    $region38: #{vae_classifier_forward.1} parent=1 // pred_check
      _
    $region39: #{vae_classifier_forward.1} parent=1 // pred_check_branch
      %105 = sbr.rel (0) target = $region41
    $region40: #{vae_classifier_forward.1} parent=1 // pred_region
      _
    $region41: #{vae_classifier_forward.1} parent=1 // pred_fallthru
      _
    // Predicated region
    $region42: #{vae_classifier_forward.1} parent=1 // pred_check
      _
    $region43: #{vae_classifier_forward.1} parent=1 // pred_check_branch
      %107 = sbr.rel (0) target = $region45
    $region44: #{vae_classifier_forward.1} parent=1 // pred_region
      _
    $region45: #{vae_classifier_forward.1} parent=1 // pred_fallthru
      _
    // Predicated region
    $region46: #{vae_classifier_forward.1} parent=1 // pred_check
      _
    $region47: #{vae_classifier_forward.1} parent=1 // pred_check_branch
      %109 = sbr.rel (0) target = $region49
    $region48: #{vae_classifier_forward.1} parent=1 // pred_region
      %s111 = ssub.s32 2048, 2048
      %112 = vsyncadd [#allocation12], %s111
      %s113 = sshll.u32 [#allocation13], 4
      %s114 = int_to_ptr.vmem [resolvable:$true] %s113
      %119 = dma.hbm_to_vmem [thread:$0]  %s11, 2048, %s114, [#allocation12], 64, 64, 4
    $region49: #{vae_classifier_forward.1} parent=1 // pred_fallthru
      _
    // Predicated region
    $region50: #{vae_classifier_forward.1} parent=1 // pred_check
      _
    $region51: #{vae_classifier_forward.1} parent=1 // pred_check_branch
      %121 = sbr.rel (0) target = $region53
    $region52: #{vae_classifier_forward.1} parent=1 // pred_region
      %s123 = ssub.s32 16, 16
      %124 = vsyncadd [#allocation15], %s123
      %s126 = sshll.u32 [#allocation14], 4
      %s127 = int_to_ptr.vmem [resolvable:$true] %s126
      %129 = dma.hbm_to_vmem [thread:$0]  %s12, 16, %s127, [#allocation15]
    $region53: #{vae_classifier_forward.1} parent=1 // pred_fallthru
      _
    // Predicated region
    $region54: #{vae_classifier_forward.1} parent=1 // pred_check
      _
    $region55: #{vae_classifier_forward.1} parent=1 // pred_check_branch
      %131 = sbr.rel (0) target = $region57
    $region56: #{vae_classifier_forward.1} parent=1 // pred_region
      %s133 = ssub.s32 2048, 2048
      %134 = vsyncadd [#allocation15], %s133
      %s135 = sshll.u32 [#allocation16], 4
      %s136 = int_to_ptr.vmem [resolvable:$true] %s135
      %141 = dma.hbm_to_vmem [thread:$0]  %s13, 2048, %s136, [#allocation15], 64, 64, 4
    $region57: #{vae_classifier_forward.1} parent=1 // pred_fallthru
      _
    // Predicated region
    $region58: #{vae_classifier_forward.1} parent=1 // pred_check
      _
    $region59: #{vae_classifier_forward.1} parent=1 // pred_check_branch
      %143 = sbr.rel (0) target = $region61
    $region60: #{vae_classifier_forward.1} parent=1 // pred_region
      %s145 = ssub.s32 16, 16
      %146 = vsyncadd [#allocation18], %s145
      %s148 = sshll.u32 [#allocation17], 4
      %s149 = int_to_ptr.vmem [resolvable:$true] %s148
      %151 = dma.hbm_to_vmem [thread:$0]  %s14, 16, %s149, [#allocation18]
    $region61: #{vae_classifier_forward.1} parent=1 // pred_fallthru
      _
    // Predicated region
    $region62: #{vae_classifier_forward.1} parent=1 // pred_check
      _
    $region63: #{vae_classifier_forward.1} parent=1 // pred_check_branch
      %153 = sbr.rel (0) target = $region65
    $region64: #{vae_classifier_forward.1} parent=1 // pred_region
      %154 = dma.done [#allocation3], 128
    $region65: #{vae_classifier_forward.1} parent=1 // pred_fallthru
      _
    // Predicated region
    $region66: #{vae_classifier_forward.1} parent=1 // pred_check
      _
    $region67: #{vae_classifier_forward.1} parent=1 // pred_check_branch
      %156 = sbr.rel (0) target = $region69
    $region68: #{vae_classifier_forward.1} parent=1 // pred_region
      %157 = dma.done [#allocation6], 2048
    $region69: #{vae_classifier_forward.1} parent=1 // pred_fallthru
      _
    // Predicated region
    $region70: #{vae_classifier_forward.1} parent=1 // pred_check
      _
    $region71: #{vae_classifier_forward.1} parent=1 // pred_check_branch
      %159 = sbr.rel (0) target = $region73
    $region72: #{vae_classifier_forward.1} parent=1 // pred_region
      %160 = dma.done [#allocation6], 4096
    $region73: #{vae_classifier_forward.1} parent=1 // pred_fallthru
      _
    // Predicated region
    $region74: #{vae_classifier_forward.1} parent=1 // pred_check
      _
    $region75: #{vae_classifier_forward.1} parent=1 // pred_check_branch
      %162 = sbr.rel (0) target = $region77
    $region76: #{vae_classifier_forward.1} parent=1 // pred_region
      %163 = dma.done [#allocation9], 32
    $region77: #{vae_classifier_forward.1} parent=1 // pred_fallthru
      _
    // Predicated region
    $region78: #{vae_classifier_forward.1} parent=1 // pred_check
      _
    $region79: #{vae_classifier_forward.1} parent=1 // pred_check_branch
      %165 = sbr.rel (0) target = $region81
    $region80: #{vae_classifier_forward.1} parent=1 // pred_region
      %166 = dma.done [#allocation9], 4096
    $region81: #{vae_classifier_forward.1} parent=1 // pred_fallthru
      _
    // Predicated region
    $region82: #{vae_classifier_forward.1} parent=1 // pred_check
      _
    $region83: #{vae_classifier_forward.1} parent=1 // pred_check_branch
      %168 = sbr.rel (0) target = $region85
    $region84: #{vae_classifier_forward.1} parent=1 // pred_region
      %169 = dma.done [#allocation12], 64
    $region85: #{vae_classifier_forward.1} parent=1 // pred_fallthru
      _
    // Predicated region
    $region86: #{vae_classifier_forward.1} parent=1 // pred_check
      _
    $region87: #{vae_classifier_forward.1} parent=1 // pred_check_branch
      %171 = sbr.rel (0) target = $region89
    $region88: #{vae_classifier_forward.1} parent=1 // pred_region
      %172 = dma.done [#allocation12], 2048
    $region89: #{vae_classifier_forward.1} parent=1 // pred_fallthru
      _
    // Predicated region
    $region90: #{vae_classifier_forward.1} parent=1 // pred_check
      _
    $region91: #{vae_classifier_forward.1} parent=1 // pred_check_branch
      %174 = sbr.rel (0) target = $region93
    $region92: #{vae_classifier_forward.1} parent=1 // pred_region
      %175 = dma.done [#allocation15], 16
    $region93: #{vae_classifier_forward.1} parent=1 // pred_fallthru
      _
    // Predicated region
    $region94: #{vae_classifier_forward.1} parent=1 // pred_check
      _
    $region95: #{vae_classifier_forward.1} parent=1 // pred_check_branch
      %177 = sbr.rel (0) target = $region97
    $region96: #{vae_classifier_forward.1} parent=1 // pred_region
      %178 = dma.done [#allocation15], 2048
    $region97: #{vae_classifier_forward.1} parent=1 // pred_fallthru
      _
    // Predicated region
    $region98: #{vae_classifier_forward.1} parent=1 // pred_check
      _
    $region99: #{vae_classifier_forward.1} parent=1 // pred_check_branch
      %180 = sbr.rel (0) target = $region101
    $region100: #{vae_classifier_forward.1} parent=1 // pred_region
      %181 = dma.done [#allocation18], 16
    $region101: #{vae_classifier_forward.1} parent=1 // pred_fallthru
      _
    %v183 = vld [vmem:[#allocation2] sm:$0xff]
    %v184 = vpack.c.bf16 %v183, %v183
    %v185 = vld [vmem:[#allocation5] sm:$0xff]
    %v186 = vld [vmem:[#allocation5 + $0x8] sm:$0xff]
    %v187 = vld [vmem:[#allocation5 + $0x10] sm:$0xff]
    %v188 = vld [vmem:[#allocation5 + $0x18] sm:$0xff]
    %v189 = vld [vmem:[#allocation5 + $0x20] sm:$0xff]
    %v190 = vld [vmem:[#allocation5 + $0x28] sm:$0xff]
    %v191 = vld [vmem:[#allocation5 + $0x30] sm:$0xff]
    %v192 = vld [vmem:[#allocation5 + $0x38] sm:$0xff]
    %v193 = vld [vmem:[#allocation5 + $0x40] sm:$0xff]
    %v194 = vld [vmem:[#allocation5 + $0x48] sm:$0xff]
    %v195 = vld [vmem:[#allocation5 + $0x50] sm:$0xff]
    %v196 = vld [vmem:[#allocation5 + $0x58] sm:$0xff]
    %v197 = vld [vmem:[#allocation5 + $0x60] sm:$0xff]
    %v198 = vld [vmem:[#allocation5 + $0x68] sm:$0xff]
    %v199 = vld [vmem:[#allocation5 + $0x70] sm:$0xff]
    %v200 = vld [vmem:[#allocation5 + $0x78] sm:$0xff]
    %v201 = vld [vmem:[%s2] sm:$0x3]
    %v203 = vlaneseq
    %v204 = vshrl.u32 %v203, 7
    %v205 = vsub.s32 0, %v204
    %v206 = vrot.slane %v201, %v205
    %v207 = vlaneseq
    %v208 = vshrl.u32 %v207, 7
    %v209 = vsub.s32 1, %v208
    %v210 = vrot.slane %v201, %v209
    %v229 = vunpack.c.l.b16 %v185
    %v230 = vunpack.c.h.b16 %v185
    %v231 = vunpack.c.l.b16 %v186
    %v232 = vunpack.c.h.b16 %v186
    %v233 = vunpack.c.l.b16 %v187
    %v234 = vunpack.c.h.b16 %v187
    %v235 = vunpack.c.l.b16 %v188
    %v236 = vunpack.c.h.b16 %v188
    %v237 = vunpack.c.l.b16 %v189
    %v238 = vunpack.c.h.b16 %v189
    %v239 = vunpack.c.l.b16 %v190
    %v240 = vunpack.c.h.b16 %v190
    %v241 = vunpack.c.l.b16 %v191
    %v242 = vunpack.c.h.b16 %v191
    %v243 = vunpack.c.l.b16 %v192
    %v244 = vunpack.c.h.b16 %v192
    %v245 = vunpack.c.l.b16 %v193
    %v246 = vunpack.c.h.b16 %v193
    %v247 = vunpack.c.l.b16 %v194
    %v248 = vunpack.c.h.b16 %v194
    %v249 = vunpack.c.l.b16 %v195
    %v250 = vunpack.c.h.b16 %v195
    %v251 = vunpack.c.l.b16 %v196
    %v252 = vunpack.c.h.b16 %v196
    %v253 = vunpack.c.l.b16 %v197
    %v254 = vunpack.c.h.b16 %v197
    %v255 = vunpack.c.l.b16 %v198
    %v256 = vunpack.c.h.b16 %v198
    %v257 = vunpack.c.l.b16 %v199
    %v258 = vunpack.c.h.b16 %v199
    %v259 = vunpack.c.l.b16 %v200
    %v260 = vunpack.c.h.b16 %v200
    %v261 = vpack.c.b16 %v231, %v229
    %v262 = vpack.c.b16 %v232, %v230
    %v263 = vpack.c.b16 %v235, %v233
    %v264 = vpack.c.b16 %v236, %v234
    %v265 = vpack.c.b16 %v239, %v237
    %v266 = vpack.c.b16 %v240, %v238
    %v267 = vpack.c.b16 %v243, %v241
    %v268 = vpack.c.b16 %v244, %v242
    %v269 = vpack.c.b16 %v247, %v245
    %v270 = vpack.c.b16 %v248, %v246
    %v271 = vpack.c.b16 %v251, %v249
    %v272 = vpack.c.b16 %v252, %v250
    %v273 = vpack.c.b16 %v255, %v253
    %v274 = vpack.c.b16 %v256, %v254
    %v275 = vpack.c.b16 %v259, %v257
    %v276 = vpack.c.b16 %v260, %v258
    %293 = vmatprep.subr.bf16.mxu0 %v262
    %294 = vmatpush1.bf16.msra.mxu0 %v261
    %295 = vmatprep.subr.bf16.mxu0 %v264
    %296 = vmatpush1.bf16.msra.mxu0 %v263
    %297 = vmatprep.subr.bf16.mxu0 %v266
    %298 = vmatpush1.bf16.msra.mxu0 %v265
    %299 = vmatprep.subr.bf16.mxu0 %v268
    %300 = vmatpush1.bf16.msra.mxu0 %v267
    %301 = vmatprep.subr.bf16.mxu0 %v270
    %302 = vmatpush1.bf16.msra.mxu0 %v269
    %303 = vmatprep.subr.bf16.mxu0 %v272
    %304 = vmatpush1.bf16.msra.mxu0 %v271
    %305 = vmatprep.subr.bf16.mxu0 %v274
    %306 = vmatpush1.bf16.msra.mxu0 %v273
    %307 = vmatprep.subr.bf16.mxu0 %v276
    %308 = vmatpush1.bf16.msra.mxu0 %v275
    %309 = vmatprep.subr.bf16.mxu0 0
    %310 = vmatpush1.bf16.msra.mxu0 0
    %311 = vmatprep.subr.bf16.mxu0 0
    %312 = vmatpush1.bf16.msra.mxu0 0
    %313 = vmatprep.subr.bf16.mxu0 0
    %314 = vmatpush1.bf16.msra.mxu0 0
    %315 = vmatprep.subr.bf16.mxu0 0
    %316 = vmatpush1.bf16.msra.mxu0 0
    %317 = vmatprep.subr.bf16.mxu0 0
    %318 = vmatpush1.bf16.msra.mxu0 0
    %319 = vmatprep.subr.bf16.mxu0 0
    %320 = vmatpush1.bf16.msra.mxu0 0
    %321 = vmatprep.subr.bf16.mxu0 0
    %322 = vmatpush1.bf16.msra.mxu0 0
    %323 = vmatprep.subr.bf16.mxu0 0
    %324 = vmatpush1.bf16.msra.mxu0 0
    %325 = vmatprep.mubr.bf16.mxu0 0
    %326 = vmatmul.mubr.bf16.gmra.mrb[0].mxu0 %v184
    %v327 = vpop.f32.mrb[0].mxu0
    %v328 = vadd.f32 %v206, %v327
    %v329 = vpop.f32.mrb[0].mxu0
    %v330 = vadd.f32 %v210, %v329
    %v331 = vpop.f32.mrb[0].mxu0
    %v332 = vpop.f32.mrb[0].mxu0
    %333 = vdwg.mxu0
    %v334 = vxor.u32 %v328, 2147483648
    %v335 = vxor.u32 %v330, 2147483648
    %v336 = vmul.f32 %v334, 1.442695
    %v337 = vpow.pop %v336
    %v338 = vmul.f32 %v335, 1.442695
    %v339 = vpow.pop %v338
    %v340 = vadd.f32 %v337, 1.0
    %v341 = vadd.f32 %v339, 1.0
    %v342 = vrcp.pop %v340
    %v343 = vmul.f32 1.0, %v342
    %v344 = vrcp.pop %v341
    %v345 = vmul.f32 1.0, %v344
    %v346 = vmul.f32 %v328, %v343
    %v347 = vmul.f32 %v330, %v345
    %v348 = vld [vmem:[%s3] sm:$0xff]
    %v349 = vunpack.c.l.bf16 %v348
    %v350 = vunpack.c.h.bf16 %v348
    %v351 = vmul.f32 %v346, %v349
    %v352 = vmul.f32 %v347, %v350
    %v353 = vpack.c.bf16 %v351, %v351
    %v354 = vpack.c.bf16 %v352, %v352
    %v355 = vld [vmem:[#allocation7] sm:$0xff]
    %v356 = vld [vmem:[#allocation7 + $0x8] sm:$0xff]
    %v357 = vld [vmem:[#allocation7 + $0x10] sm:$0xff]
    %v358 = vld [vmem:[#allocation7 + $0x18] sm:$0xff]
    %v359 = vld [vmem:[#allocation7 + $0x20] sm:$0xff]
    %v360 = vld [vmem:[#allocation7 + $0x28] sm:$0xff]
    %v361 = vld [vmem:[#allocation7 + $0x30] sm:$0xff]
    %v362 = vld [vmem:[#allocation7 + $0x38] sm:$0xff]
    %v363 = vld [vmem:[#allocation7 + $0x40] sm:$0xff]
    %v364 = vld [vmem:[#allocation7 + $0x48] sm:$0xff]
    %v365 = vld [vmem:[#allocation7 + $0x50] sm:$0xff]
    %v366 = vld [vmem:[#allocation7 + $0x58] sm:$0xff]
    %v367 = vld [vmem:[#allocation7 + $0x60] sm:$0xff]
    %v368 = vld [vmem:[#allocation7 + $0x68] sm:$0xff]
    %v369 = vld [vmem:[#allocation7 + $0x70] sm:$0xff]
    %v370 = vld [vmem:[#allocation7 + $0x78] sm:$0xff]
    %v371 = vld [vmem:[#allocation7 + $0x80] sm:$0xff]
    %v372 = vld [vmem:[#allocation7 + $0x88] sm:$0xff]
    %v373 = vld [vmem:[#allocation7 + $0x90] sm:$0xff]
    %v374 = vld [vmem:[#allocation7 + $0x98] sm:$0xff]
    %v375 = vld [vmem:[#allocation7 + $0xa0] sm:$0xff]
    %v376 = vld [vmem:[#allocation7 + $0xa8] sm:$0xff]
    %v377 = vld [vmem:[#allocation7 + $0xb0] sm:$0xff]
    %v378 = vld [vmem:[#allocation7 + $0xb8] sm:$0xff]
    %v379 = vld [vmem:[#allocation7 + $0xc0] sm:$0xff]
    %v380 = vld [vmem:[#allocation7 + $0xc8] sm:$0xff]
    %v381 = vld [vmem:[#allocation7 + $0xd0] sm:$0xff]
    %v382 = vld [vmem:[#allocation7 + $0xd8] sm:$0xff]
    %v383 = vld [vmem:[#allocation7 + $0xe0] sm:$0xff]
    %v384 = vld [vmem:[#allocation7 + $0xe8] sm:$0xff]
    %v385 = vld [vmem:[#allocation7 + $0xf0] sm:$0xff]
    %v386 = vld [vmem:[#allocation7 + $0xf8] sm:$0xff]
    %v387 = vld [vmem:[#allocation8] sm:$0x3]
    %v389 = vlaneseq
    %v390 = vshrl.u32 %v389, 7
    %v391 = vsub.s32 0, %v390
    %v392 = vrot.slane %v387, %v391
    %v393 = vlaneseq
    %v394 = vshrl.u32 %v393, 7
    %v395 = vsub.s32 1, %v394
    %v396 = vrot.slane %v387, %v395
    %v431 = vunpack.c.l.b16 %v355
    %v432 = vunpack.c.h.b16 %v355
    %v433 = vunpack.c.l.b16 %v356
    %v434 = vunpack.c.h.b16 %v356
    %v435 = vunpack.c.l.b16 %v357
    %v436 = vunpack.c.h.b16 %v357
    %v437 = vunpack.c.l.b16 %v358
    %v438 = vunpack.c.h.b16 %v358
    %v439 = vunpack.c.l.b16 %v359
    %v440 = vunpack.c.h.b16 %v359
    %v441 = vunpack.c.l.b16 %v360
    %v442 = vunpack.c.h.b16 %v360
    %v443 = vunpack.c.l.b16 %v361
    %v444 = vunpack.c.h.b16 %v361
    %v445 = vunpack.c.l.b16 %v362
    %v446 = vunpack.c.h.b16 %v362
    %v447 = vunpack.c.l.b16 %v363
    %v448 = vunpack.c.h.b16 %v363
    %v449 = vunpack.c.l.b16 %v364
    %v450 = vunpack.c.h.b16 %v364
    %v451 = vunpack.c.l.b16 %v365
    %v452 = vunpack.c.h.b16 %v365
    %v453 = vunpack.c.l.b16 %v366
    %v454 = vunpack.c.h.b16 %v366
    %v455 = vunpack.c.l.b16 %v367
    %v456 = vunpack.c.h.b16 %v367
    %v457 = vunpack.c.l.b16 %v368
    %v458 = vunpack.c.h.b16 %v368
    %v459 = vunpack.c.l.b16 %v369
    %v460 = vunpack.c.h.b16 %v369
    %v461 = vunpack.c.l.b16 %v370
    %v462 = vunpack.c.h.b16 %v370
    %v463 = vunpack.c.l.b16 %v371
    %v464 = vunpack.c.h.b16 %v371
    %v465 = vunpack.c.l.b16 %v372
    %v466 = vunpack.c.h.b16 %v372
    %v467 = vunpack.c.l.b16 %v373
    %v468 = vunpack.c.h.b16 %v373
    %v469 = vunpack.c.l.b16 %v374
    %v470 = vunpack.c.h.b16 %v374
    %v471 = vunpack.c.l.b16 %v375
    %v472 = vunpack.c.h.b16 %v375
    %v473 = vunpack.c.l.b16 %v376
    %v474 = vunpack.c.h.b16 %v376
    %v475 = vunpack.c.l.b16 %v377
    %v476 = vunpack.c.h.b16 %v377
    %v477 = vunpack.c.l.b16 %v378
    %v478 = vunpack.c.h.b16 %v378
    %v479 = vunpack.c.l.b16 %v379
    %v480 = vunpack.c.h.b16 %v379
    %v481 = vunpack.c.l.b16 %v380
    %v482 = vunpack.c.h.b16 %v380
    %v483 = vunpack.c.l.b16 %v381
    %v484 = vunpack.c.h.b16 %v381
    %v485 = vunpack.c.l.b16 %v382
    %v486 = vunpack.c.h.b16 %v382
    %v487 = vunpack.c.l.b16 %v383
    %v488 = vunpack.c.h.b16 %v383
    %v489 = vunpack.c.l.b16 %v384
    %v490 = vunpack.c.h.b16 %v384
    %v491 = vunpack.c.l.b16 %v385
    %v492 = vunpack.c.h.b16 %v385
    %v493 = vunpack.c.l.b16 %v386
    %v494 = vunpack.c.h.b16 %v386
    %v495 = vpack.c.b16 %v433, %v431
    %v496 = vpack.c.b16 %v434, %v432
    %v497 = vpack.c.b16 %v437, %v435
    %v498 = vpack.c.b16 %v438, %v436
    %v499 = vpack.c.b16 %v441, %v439
    %v500 = vpack.c.b16 %v442, %v440
    %v501 = vpack.c.b16 %v445, %v443
    %v502 = vpack.c.b16 %v446, %v444
    %v503 = vpack.c.b16 %v449, %v447
    %v504 = vpack.c.b16 %v450, %v448
    %v505 = vpack.c.b16 %v453, %v451
    %v506 = vpack.c.b16 %v454, %v452
    %v507 = vpack.c.b16 %v457, %v455
    %v508 = vpack.c.b16 %v458, %v456
    %v509 = vpack.c.b16 %v461, %v459
    %v510 = vpack.c.b16 %v462, %v460
    %v511 = vpack.c.b16 %v465, %v463
    %v512 = vpack.c.b16 %v466, %v464
    %v513 = vpack.c.b16 %v469, %v467
    %v514 = vpack.c.b16 %v470, %v468
    %v515 = vpack.c.b16 %v473, %v471
    %v516 = vpack.c.b16 %v474, %v472
    %v517 = vpack.c.b16 %v477, %v475
    %v518 = vpack.c.b16 %v478, %v476
    %v519 = vpack.c.b16 %v481, %v479
    %v520 = vpack.c.b16 %v482, %v480
    %v521 = vpack.c.b16 %v485, %v483
    %v522 = vpack.c.b16 %v486, %v484
    %v523 = vpack.c.b16 %v489, %v487
    %v524 = vpack.c.b16 %v490, %v488
    %v525 = vpack.c.b16 %v493, %v491
    %v526 = vpack.c.b16 %v494, %v492
    %559 = vmatprep.subr.bf16.mxu0 %v496
    %560 = vmatpush1.bf16.msra.mxu0 %v495
    %561 = vmatprep.subr.bf16.mxu0 %v498
    %562 = vmatpush1.bf16.msra.mxu0 %v497
    %563 = vmatprep.subr.bf16.mxu0 %v500
    %564 = vmatpush1.bf16.msra.mxu0 %v499
    %565 = vmatprep.subr.bf16.mxu0 %v502
    %566 = vmatpush1.bf16.msra.mxu0 %v501
    %567 = vmatprep.subr.bf16.mxu0 %v504
    %568 = vmatpush1.bf16.msra.mxu0 %v503
    %569 = vmatprep.subr.bf16.mxu0 %v506
    %570 = vmatpush1.bf16.msra.mxu0 %v505
    %571 = vmatprep.subr.bf16.mxu0 %v508
    %572 = vmatpush1.bf16.msra.mxu0 %v507
    %573 = vmatprep.subr.bf16.mxu0 %v510
    %574 = vmatpush1.bf16.msra.mxu0 %v509
    %575 = vmatprep.subr.bf16.mxu0 %v512
    %576 = vmatpush1.bf16.msra.mxu0 %v511
    %577 = vmatprep.subr.bf16.mxu0 %v514
    %578 = vmatpush1.bf16.msra.mxu0 %v513
    %579 = vmatprep.subr.bf16.mxu0 %v516
    %580 = vmatpush1.bf16.msra.mxu0 %v515
    %581 = vmatprep.subr.bf16.mxu0 %v518
    %582 = vmatpush1.bf16.msra.mxu0 %v517
    %583 = vmatprep.subr.bf16.mxu0 %v520
    %584 = vmatpush1.bf16.msra.mxu0 %v519
    %585 = vmatprep.subr.bf16.mxu0 %v522
    %586 = vmatpush1.bf16.msra.mxu0 %v521
    %587 = vmatprep.subr.bf16.mxu0 %v524
    %588 = vmatpush1.bf16.msra.mxu0 %v523
    %589 = vmatprep.subr.bf16.mxu0 %v526
    %590 = vmatpush1.bf16.msra.mxu0 %v525
    %591 = vmatprep.mubr.bf16.mxu0 %v354
    %592 = vmatmul.mubr.bf16.gmra.mrb[0].mxu0 %v353
    %v593 = vpop.f32.mrb[0].mxu0
    %v594 = vadd.f32 %v392, %v593
    %v595 = vpop.f32.mrb[0].mxu0
    %v596 = vadd.f32 %v396, %v595
    %v597 = vpop.f32.mrb[0].mxu0
    %v598 = vpop.f32.mrb[0].mxu0
    %599 = vdwg.mxu0
    %600 = vst [vmem:[#allocation20] sm:$0xff] %v594
    %601 = vst [vmem:[#allocation22] sm:$0xff] %v596
    %v602 = vld [vmem:[%s6] sm:$0xff]
    %v603 = vmul.f32 %v596, 0.5
    %v604 = vmul.f32 %v603, 1.442695
    %v605 = vpow.pop %v604
    %v606 = vmul.f32 %v602, %v605
    %v607 = vadd.f32 %v594, %v606
    %v608 = vpack.c.bf16 %v607, %v607
    %v609 = vld [vmem:[#allocation10] sm:$0xff]
    %v610 = vld [vmem:[#allocation10 + $0x8] sm:$0xff]
    %v611 = vld [vmem:[#allocation10 + $0x10] sm:$0xff]
    %v612 = vld [vmem:[#allocation10 + $0x18] sm:$0xff]
    %v613 = vld [vmem:[#allocation10 + $0x20] sm:$0xff]
    %v614 = vld [vmem:[#allocation10 + $0x28] sm:$0xff]
    %v615 = vld [vmem:[#allocation10 + $0x30] sm:$0xff]
    %v616 = vld [vmem:[#allocation10 + $0x38] sm:$0xff]
    %v617 = vld [vmem:[#allocation10 + $0x40] sm:$0xff]
    %v618 = vld [vmem:[#allocation10 + $0x48] sm:$0xff]
    %v619 = vld [vmem:[#allocation10 + $0x50] sm:$0xff]
    %v620 = vld [vmem:[#allocation10 + $0x58] sm:$0xff]
    %v621 = vld [vmem:[#allocation10 + $0x60] sm:$0xff]
    %v622 = vld [vmem:[#allocation10 + $0x68] sm:$0xff]
    %v623 = vld [vmem:[#allocation10 + $0x70] sm:$0xff]
    %v624 = vld [vmem:[#allocation10 + $0x78] sm:$0xff]
    %v625 = vld [vmem:[#allocation10 + $0x80] sm:$0xff]
    %v626 = vld [vmem:[#allocation10 + $0x88] sm:$0xff]
    %v627 = vld [vmem:[#allocation10 + $0x90] sm:$0xff]
    %v628 = vld [vmem:[#allocation10 + $0x98] sm:$0xff]
    %v629 = vld [vmem:[#allocation10 + $0xa0] sm:$0xff]
    %v630 = vld [vmem:[#allocation10 + $0xa8] sm:$0xff]
    %v631 = vld [vmem:[#allocation10 + $0xb0] sm:$0xff]
    %v632 = vld [vmem:[#allocation10 + $0xb8] sm:$0xff]
    %v633 = vld [vmem:[#allocation10 + $0xc0] sm:$0xff]
    %v634 = vld [vmem:[#allocation10 + $0xc8] sm:$0xff]
    %v635 = vld [vmem:[#allocation10 + $0xd0] sm:$0xff]
    %v636 = vld [vmem:[#allocation10 + $0xd8] sm:$0xff]
    %v637 = vld [vmem:[#allocation10 + $0xe0] sm:$0xff]
    %v638 = vld [vmem:[#allocation10 + $0xe8] sm:$0xff]
    %v639 = vld [vmem:[#allocation10 + $0xf0] sm:$0xff]
    %v640 = vld [vmem:[#allocation10 + $0xf8] sm:$0xff]
    %v641 = vld [vmem:[#allocation11] sm:$0xf]
    %v643 = vlaneseq
    %v644 = vshrl.u32 %v643, 7
    %v645 = vsub.s32 0, %v644
    %v646 = vrot.slane %v641, %v645
    %v647 = vlaneseq
    %v648 = vshrl.u32 %v647, 7
    %v649 = vsub.s32 1, %v648
    %v650 = vrot.slane %v641, %v649
    %v651 = vlaneseq
    %v652 = vshrl.u32 %v651, 7
    %v653 = vsub.s32 2, %v652
    %v654 = vrot.slane %v641, %v653
    %v655 = vlaneseq
    %v656 = vshrl.u32 %v655, 7
    %v657 = vsub.s32 3, %v656
    %v658 = vrot.slane %v641, %v657
    %v695 = vunpack.c.l.b16 %v609
    %v696 = vunpack.c.h.b16 %v609
    %v697 = vunpack.c.l.b16 %v610
    %v698 = vunpack.c.h.b16 %v610
    %v699 = vunpack.c.l.b16 %v611
    %v700 = vunpack.c.h.b16 %v611
    %v701 = vunpack.c.l.b16 %v612
    %v702 = vunpack.c.h.b16 %v612
    %v703 = vunpack.c.l.b16 %v613
    %v704 = vunpack.c.h.b16 %v613
    %v705 = vunpack.c.l.b16 %v614
    %v706 = vunpack.c.h.b16 %v614
    %v707 = vunpack.c.l.b16 %v615
    %v708 = vunpack.c.h.b16 %v615
    %v709 = vunpack.c.l.b16 %v616
    %v710 = vunpack.c.h.b16 %v616
    %v711 = vunpack.c.l.b16 %v617
    %v712 = vunpack.c.h.b16 %v617
    %v713 = vunpack.c.l.b16 %v618
    %v714 = vunpack.c.h.b16 %v618
    %v715 = vunpack.c.l.b16 %v619
    %v716 = vunpack.c.h.b16 %v619
    %v717 = vunpack.c.l.b16 %v620
    %v718 = vunpack.c.h.b16 %v620
    %v719 = vunpack.c.l.b16 %v621
    %v720 = vunpack.c.h.b16 %v621
    %v721 = vunpack.c.l.b16 %v622
    %v722 = vunpack.c.h.b16 %v622
    %v723 = vunpack.c.l.b16 %v623
    %v724 = vunpack.c.h.b16 %v623
    %v725 = vunpack.c.l.b16 %v624
    %v726 = vunpack.c.h.b16 %v624
    %v727 = vunpack.c.l.b16 %v625
    %v728 = vunpack.c.h.b16 %v625
    %v729 = vunpack.c.l.b16 %v626
    %v730 = vunpack.c.h.b16 %v626
    %v731 = vunpack.c.l.b16 %v627
    %v732 = vunpack.c.h.b16 %v627
    %v733 = vunpack.c.l.b16 %v628
    %v734 = vunpack.c.h.b16 %v628
    %v735 = vunpack.c.l.b16 %v629
    %v736 = vunpack.c.h.b16 %v629
    %v737 = vunpack.c.l.b16 %v630
    %v738 = vunpack.c.h.b16 %v630
    %v739 = vunpack.c.l.b16 %v631
    %v740 = vunpack.c.h.b16 %v631
    %v741 = vunpack.c.l.b16 %v632
    %v742 = vunpack.c.h.b16 %v632
    %v743 = vunpack.c.l.b16 %v633
    %v744 = vunpack.c.h.b16 %v633
    %v745 = vunpack.c.l.b16 %v634
    %v746 = vunpack.c.h.b16 %v634
    %v747 = vunpack.c.l.b16 %v635
    %v748 = vunpack.c.h.b16 %v635
    %v749 = vunpack.c.l.b16 %v636
    %v750 = vunpack.c.h.b16 %v636
    %v751 = vunpack.c.l.b16 %v637
    %v752 = vunpack.c.h.b16 %v637
    %v753 = vunpack.c.l.b16 %v638
    %v754 = vunpack.c.h.b16 %v638
    %v755 = vunpack.c.l.b16 %v639
    %v756 = vunpack.c.h.b16 %v639
    %v757 = vunpack.c.l.b16 %v640
    %v758 = vunpack.c.h.b16 %v640
    %v759 = vpack.c.b16 %v699, %v695
    %v760 = vpack.c.b16 %v700, %v696
    %v761 = vpack.c.b16 %v701, %v697
    %v762 = vpack.c.b16 %v702, %v698
    %v763 = vpack.c.b16 %v707, %v703
    %v764 = vpack.c.b16 %v708, %v704
    %v765 = vpack.c.b16 %v709, %v705
    %v766 = vpack.c.b16 %v710, %v706
    %v767 = vpack.c.b16 %v715, %v711
    %v768 = vpack.c.b16 %v716, %v712
    %v769 = vpack.c.b16 %v717, %v713
    %v770 = vpack.c.b16 %v718, %v714
    %v771 = vpack.c.b16 %v723, %v719
    %v772 = vpack.c.b16 %v724, %v720
    %v773 = vpack.c.b16 %v725, %v721
    %v774 = vpack.c.b16 %v726, %v722
    %v775 = vpack.c.b16 %v731, %v727
    %v776 = vpack.c.b16 %v732, %v728
    %v777 = vpack.c.b16 %v733, %v729
    %v778 = vpack.c.b16 %v734, %v730
    %v779 = vpack.c.b16 %v739, %v735
    %v780 = vpack.c.b16 %v740, %v736
    %v781 = vpack.c.b16 %v741, %v737
    %v782 = vpack.c.b16 %v742, %v738
    %v783 = vpack.c.b16 %v747, %v743
    %v784 = vpack.c.b16 %v748, %v744
    %v785 = vpack.c.b16 %v749, %v745
    %v786 = vpack.c.b16 %v750, %v746
    %v787 = vpack.c.b16 %v755, %v751
    %v788 = vpack.c.b16 %v756, %v752
    %v789 = vpack.c.b16 %v757, %v753
    %v790 = vpack.c.b16 %v758, %v754
    %823 = vmatprep.subr.bf16.mxu0 %v760
    %824 = vmatpush1.bf16.msra.mxu0 %v759
    %825 = vmatprep.subr.bf16.mxu0 %v764
    %826 = vmatpush1.bf16.msra.mxu0 %v763
    %827 = vmatprep.subr.bf16.mxu0 %v768
    %828 = vmatpush1.bf16.msra.mxu0 %v767
    %829 = vmatprep.subr.bf16.mxu0 %v772
    %830 = vmatpush1.bf16.msra.mxu0 %v771
    %831 = vmatprep.subr.bf16.mxu0 %v776
    %832 = vmatpush1.bf16.msra.mxu0 %v775
    %833 = vmatprep.subr.bf16.mxu0 %v780
    %834 = vmatpush1.bf16.msra.mxu0 %v779
    %835 = vmatprep.subr.bf16.mxu0 %v784
    %836 = vmatpush1.bf16.msra.mxu0 %v783
    %837 = vmatprep.subr.bf16.mxu0 %v788
    %838 = vmatpush1.bf16.msra.mxu0 %v787
    %839 = vmatprep.subr.bf16.mxu0 0
    %840 = vmatpush1.bf16.msra.mxu0 0
    %841 = vmatprep.subr.bf16.mxu0 0
    %842 = vmatpush1.bf16.msra.mxu0 0
    %843 = vmatprep.subr.bf16.mxu0 0
    %844 = vmatpush1.bf16.msra.mxu0 0
    %845 = vmatprep.subr.bf16.mxu0 0
    %846 = vmatpush1.bf16.msra.mxu0 0
    %847 = vmatprep.subr.bf16.mxu0 0
    %848 = vmatpush1.bf16.msra.mxu0 0
    %849 = vmatprep.subr.bf16.mxu0 0
    %850 = vmatpush1.bf16.msra.mxu0 0
    %851 = vmatprep.subr.bf16.mxu0 0
    %852 = vmatpush1.bf16.msra.mxu0 0
    %853 = vmatprep.subr.bf16.mxu0 0
    %854 = vmatpush1.bf16.msra.mxu0 0
    %855 = vmatprep.mubr.bf16.mxu0 0
    %856 = vmatmul.mubr.bf16.gmra.mrb[0].mxu0 %v608
    %v857 = vpop.f32.mrb[0].mxu0
    %v858 = vadd.f32 %v646, %v857
    %v859 = vpop.f32.mrb[0].mxu0
    %v860 = vadd.f32 %v650, %v859
    %v861 = vpop.f32.mrb[0].mxu0
    %v862 = vpop.f32.mrb[0].mxu0
    %863 = vdwg.mxu0
    %864 = vmatprep.subr.bf16.mxu0 %v762
    %865 = vmatpush1.bf16.msra.mxu0 %v761
    %866 = vmatprep.subr.bf16.mxu0 %v766
    %867 = vmatpush1.bf16.msra.mxu0 %v765
    %868 = vmatprep.subr.bf16.mxu0 %v770
    %869 = vmatpush1.bf16.msra.mxu0 %v769
    %870 = vmatprep.subr.bf16.mxu0 %v774
    %871 = vmatpush1.bf16.msra.mxu0 %v773
    %872 = vmatprep.subr.bf16.mxu0 %v778
    %873 = vmatpush1.bf16.msra.mxu0 %v777
    %874 = vmatprep.subr.bf16.mxu0 %v782
    %875 = vmatpush1.bf16.msra.mxu0 %v781
    %876 = vmatprep.subr.bf16.mxu0 %v786
    %877 = vmatpush1.bf16.msra.mxu0 %v785
    %878 = vmatprep.subr.bf16.mxu0 %v790
    %879 = vmatpush1.bf16.msra.mxu0 %v789
    %880 = vmatprep.subr.bf16.mxu0 0
    %881 = vmatpush1.bf16.msra.mxu0 0
    %882 = vmatprep.subr.bf16.mxu0 0
    %883 = vmatpush1.bf16.msra.mxu0 0
    %884 = vmatprep.subr.bf16.mxu0 0
    %885 = vmatpush1.bf16.msra.mxu0 0
    %886 = vmatprep.subr.bf16.mxu0 0
    %887 = vmatpush1.bf16.msra.mxu0 0
    %888 = vmatprep.subr.bf16.mxu0 0
    %889 = vmatpush1.bf16.msra.mxu0 0
    %890 = vmatprep.subr.bf16.mxu0 0
    %891 = vmatpush1.bf16.msra.mxu0 0
    %892 = vmatprep.subr.bf16.mxu0 0
    %893 = vmatpush1.bf16.msra.mxu0 0
    %894 = vmatprep.subr.bf16.mxu0 0
    %895 = vmatpush1.bf16.msra.mxu0 0
    %896 = vmatprep.mubr.bf16.mxu0 0
    %897 = vmatmul.mubr.bf16.gmra.mrb[0].mxu0 %v608
    %v898 = vpop.f32.mrb[0].mxu0
    %v899 = vadd.f32 %v654, %v898
    %v900 = vpop.f32.mrb[0].mxu0
    %v901 = vadd.f32 %v658, %v900
    %v902 = vpop.f32.mrb[0].mxu0
    %v903 = vpop.f32.mrb[0].mxu0
    %904 = vdwg.mxu0
    %v905 = vxor.u32 %v858, 2147483648
    %v906 = vxor.u32 %v860, 2147483648
    %v907 = vmul.f32 %v905, 1.442695
    %v908 = vpow.pop %v907
    %v909 = vmul.f32 %v906, 1.442695
    %v910 = vpow.pop %v909
    %v911 = vadd.f32 %v908, 1.0
    %v912 = vadd.f32 %v910, 1.0
    %v913 = vrcp.pop %v911
    %v914 = vmul.f32 1.0, %v913
    %v915 = vrcp.pop %v912
    %v916 = vmul.f32 1.0, %v915
    %v917 = vmul.f32 %v858, %v914
    %v918 = vmul.f32 %v860, %v916
    %v919 = vld [vmem:[%s9] sm:$0xff]
    %v920 = vunpack.c.l.bf16 %v919
    %v921 = vunpack.c.h.bf16 %v919
    %v922 = vmul.f32 %v917, %v920
    %v923 = vmul.f32 %v918, %v921
    %v924 = vxor.u32 %v899, 2147483648
    %v925 = vxor.u32 %v901, 2147483648
    %v926 = vmul.f32 %v924, 1.442695
    %v927 = vpow.pop %v926
    %v928 = vmul.f32 %v925, 1.442695
    %v929 = vpow.pop %v928
    %v930 = vadd.f32 %v927, 1.0
    %v931 = vadd.f32 %v929, 1.0
    %v932 = vrcp.pop %v930
    %v933 = vmul.f32 1.0, %v932
    %v934 = vrcp.pop %v931
    %v935 = vmul.f32 1.0, %v934
    %v936 = vmul.f32 %v899, %v933
    %v937 = vmul.f32 %v901, %v935
    %v938 = vld [vmem:[%s10] sm:$0xff]
    %v939 = vunpack.c.l.bf16 %v938
    %v940 = vunpack.c.h.bf16 %v938
    %v941 = vmul.f32 %v936, %v939
    %v942 = vmul.f32 %v937, %v940
    %v943 = vpack.c.bf16 %v922, %v922
    %v944 = vpack.c.bf16 %v923, %v923
    %v945 = vld [vmem:[#allocation13] sm:$0xf]
    %v946 = vld [vmem:[#allocation13 + $0x4] sm:$0xf]
    %v947 = vld [vmem:[#allocation13 + $0x8] sm:$0xf]
    %v948 = vld [vmem:[#allocation13 + $0xc] sm:$0xf]
    %v949 = vld [vmem:[#allocation13 + $0x10] sm:$0xf]
    %v950 = vld [vmem:[#allocation13 + $0x14] sm:$0xf]
    %v951 = vld [vmem:[#allocation13 + $0x18] sm:$0xf]
    %v952 = vld [vmem:[#allocation13 + $0x1c] sm:$0xf]
    %v953 = vld [vmem:[#allocation13 + $0x20] sm:$0xf]
    %v954 = vld [vmem:[#allocation13 + $0x24] sm:$0xf]
    %v955 = vld [vmem:[#allocation13 + $0x28] sm:$0xf]
    %v956 = vld [vmem:[#allocation13 + $0x2c] sm:$0xf]
    %v957 = vld [vmem:[#allocation13 + $0x30] sm:$0xf]
    %v958 = vld [vmem:[#allocation13 + $0x34] sm:$0xf]
    %v959 = vld [vmem:[#allocation13 + $0x38] sm:$0xf]
    %v960 = vld [vmem:[#allocation13 + $0x3c] sm:$0xf]
    %v961 = vld [vmem:[#allocation13 + $0x40] sm:$0xf]
    %v962 = vld [vmem:[#allocation13 + $0x44] sm:$0xf]
    %v963 = vld [vmem:[#allocation13 + $0x48] sm:$0xf]
    %v964 = vld [vmem:[#allocation13 + $0x4c] sm:$0xf]
    %v965 = vld [vmem:[#allocation13 + $0x50] sm:$0xf]
    %v966 = vld [vmem:[#allocation13 + $0x54] sm:$0xf]
    %v967 = vld [vmem:[#allocation13 + $0x58] sm:$0xf]
    %v968 = vld [vmem:[#allocation13 + $0x5c] sm:$0xf]
    %v969 = vld [vmem:[#allocation13 + $0x60] sm:$0xf]
    %v970 = vld [vmem:[#allocation13 + $0x64] sm:$0xf]
    %v971 = vld [vmem:[#allocation13 + $0x68] sm:$0xf]
    %v972 = vld [vmem:[#allocation13 + $0x6c] sm:$0xf]
    %v973 = vld [vmem:[#allocation13 + $0x70] sm:$0xf]
    %v974 = vld [vmem:[#allocation13 + $0x74] sm:$0xf]
    %v975 = vld [vmem:[#allocation13 + $0x78] sm:$0xf]
    %v976 = vld [vmem:[#allocation13 + $0x7c] sm:$0xf]
    %v977 = vld [vmem:[#allocation14] sm:$0x1]
    %v979 = vlaneseq
    %v980 = vshrl.u32 %v979, 7
    %v981 = vsub.s32 0, %v980
    %v982 = vrot.slane %v977, %v981
    %v1016 = vunpack.c.l.b16 %v945
    %v1017 = vunpack.c.l.b16 %v946
    %v1018 = vunpack.c.l.b16 %v947
    %v1019 = vunpack.c.l.b16 %v948
    %v1020 = vunpack.c.l.b16 %v949
    %v1021 = vunpack.c.l.b16 %v950
    %v1022 = vunpack.c.l.b16 %v951
    %v1023 = vunpack.c.l.b16 %v952
    %v1024 = vunpack.c.l.b16 %v953
    %v1025 = vunpack.c.l.b16 %v954
    %v1026 = vunpack.c.l.b16 %v955
    %v1027 = vunpack.c.l.b16 %v956
    %v1028 = vunpack.c.l.b16 %v957
    %v1029 = vunpack.c.l.b16 %v958
    %v1030 = vunpack.c.l.b16 %v959
    %v1031 = vunpack.c.l.b16 %v960
    %v1032 = vunpack.c.l.b16 %v961
    %v1033 = vunpack.c.l.b16 %v962
    %v1034 = vunpack.c.l.b16 %v963
    %v1035 = vunpack.c.l.b16 %v964
    %v1036 = vunpack.c.l.b16 %v965
    %v1037 = vunpack.c.l.b16 %v966
    %v1038 = vunpack.c.l.b16 %v967
    %v1039 = vunpack.c.l.b16 %v968
    %v1040 = vunpack.c.l.b16 %v969
    %v1041 = vunpack.c.l.b16 %v970
    %v1042 = vunpack.c.l.b16 %v971
    %v1043 = vunpack.c.l.b16 %v972
    %v1044 = vunpack.c.l.b16 %v973
    %v1045 = vunpack.c.l.b16 %v974
    %v1046 = vunpack.c.l.b16 %v975
    %v1047 = vunpack.c.l.b16 %v976
    %v1048 = vpack.c.b16 %v1017, %v1016
    %v1049 = vpack.c.b16 %v1019, %v1018
    %v1050 = vpack.c.b16 %v1021, %v1020
    %v1051 = vpack.c.b16 %v1023, %v1022
    %v1052 = vpack.c.b16 %v1025, %v1024
    %v1053 = vpack.c.b16 %v1027, %v1026
    %v1054 = vpack.c.b16 %v1029, %v1028
    %v1055 = vpack.c.b16 %v1031, %v1030
    %v1056 = vpack.c.b16 %v1033, %v1032
    %v1057 = vpack.c.b16 %v1035, %v1034
    %v1058 = vpack.c.b16 %v1037, %v1036
    %v1059 = vpack.c.b16 %v1039, %v1038
    %v1060 = vpack.c.b16 %v1041, %v1040
    %v1061 = vpack.c.b16 %v1043, %v1042
    %v1062 = vpack.c.b16 %v1045, %v1044
    %v1063 = vpack.c.b16 %v1047, %v1046
    %1080 = vmatprep.subr.bf16.mxu0 0
    %1081 = vmatpush1.bf16.msra.mxu0 %v1048
    %1082 = vmatprep.subr.bf16.mxu0 0
    %1083 = vmatpush1.bf16.msra.mxu0 %v1049
    %1084 = vmatprep.subr.bf16.mxu0 0
    %1085 = vmatpush1.bf16.msra.mxu0 %v1050
    %1086 = vmatprep.subr.bf16.mxu0 0
    %1087 = vmatpush1.bf16.msra.mxu0 %v1051
    %1088 = vmatprep.subr.bf16.mxu0 0
    %1089 = vmatpush1.bf16.msra.mxu0 %v1052
    %1090 = vmatprep.subr.bf16.mxu0 0
    %1091 = vmatpush1.bf16.msra.mxu0 %v1053
    %1092 = vmatprep.subr.bf16.mxu0 0
    %1093 = vmatpush1.bf16.msra.mxu0 %v1054
    %1094 = vmatprep.subr.bf16.mxu0 0
    %1095 = vmatpush1.bf16.msra.mxu0 %v1055
    %1096 = vmatprep.subr.bf16.mxu0 0
    %1097 = vmatpush1.bf16.msra.mxu0 %v1056
    %1098 = vmatprep.subr.bf16.mxu0 0
    %1099 = vmatpush1.bf16.msra.mxu0 %v1057
    %1100 = vmatprep.subr.bf16.mxu0 0
    %1101 = vmatpush1.bf16.msra.mxu0 %v1058
    %1102 = vmatprep.subr.bf16.mxu0 0
    %1103 = vmatpush1.bf16.msra.mxu0 %v1059
    %1104 = vmatprep.subr.bf16.mxu0 0
    %1105 = vmatpush1.bf16.msra.mxu0 %v1060
    %1106 = vmatprep.subr.bf16.mxu0 0
    %1107 = vmatpush1.bf16.msra.mxu0 %v1061
    %1108 = vmatprep.subr.bf16.mxu0 0
    %1109 = vmatpush1.bf16.msra.mxu0 %v1062
    %1110 = vmatprep.subr.bf16.mxu0 0
    %1111 = vmatpush1.bf16.msra.mxu0 %v1063
    %1112 = vmatprep.mubr.bf16.mxu0 %v944
    %1113 = vmatmul.mubr.bf16.gmra.mrb[0].mxu0 %v943
    %v1114 = vpop.f32.mrb[0].mxu0
    %v1115 = vadd.f32 %v982, %v1114
    %v1116 = vpop.f32.mrb[0].mxu0
    %v1117 = vpop.f32.mrb[0].mxu0
    %v1118 = vpop.f32.mrb[0].mxu0
    %1119 = vdwg.mxu0
    %1120 = vst [vmem:[#allocation19] sm:$0xff] %v1115
    %v1121 = vpack.c.bf16 %v941, %v941
    %v1122 = vpack.c.bf16 %v942, %v942
    %v1123 = vld [vmem:[#allocation16] sm:$0xf]
    %v1124 = vld [vmem:[#allocation16 + $0x4] sm:$0xf]
    %v1125 = vld [vmem:[#allocation16 + $0x8] sm:$0xf]
    %v1126 = vld [vmem:[#allocation16 + $0xc] sm:$0xf]
    %v1127 = vld [vmem:[#allocation16 + $0x10] sm:$0xf]
    %v1128 = vld [vmem:[#allocation16 + $0x14] sm:$0xf]
    %v1129 = vld [vmem:[#allocation16 + $0x18] sm:$0xf]
    %v1130 = vld [vmem:[#allocation16 + $0x1c] sm:$0xf]
    %v1131 = vld [vmem:[#allocation16 + $0x20] sm:$0xf]
    %v1132 = vld [vmem:[#allocation16 + $0x24] sm:$0xf]
    %v1133 = vld [vmem:[#allocation16 + $0x28] sm:$0xf]
    %v1134 = vld [vmem:[#allocation16 + $0x2c] sm:$0xf]
    %v1135 = vld [vmem:[#allocation16 + $0x30] sm:$0xf]
    %v1136 = vld [vmem:[#allocation16 + $0x34] sm:$0xf]
    %v1137 = vld [vmem:[#allocation16 + $0x38] sm:$0xf]
    %v1138 = vld [vmem:[#allocation16 + $0x3c] sm:$0xf]
    %v1139 = vld [vmem:[#allocation16 + $0x40] sm:$0xf]
    %v1140 = vld [vmem:[#allocation16 + $0x44] sm:$0xf]
    %v1141 = vld [vmem:[#allocation16 + $0x48] sm:$0xf]
    %v1142 = vld [vmem:[#allocation16 + $0x4c] sm:$0xf]
    %v1143 = vld [vmem:[#allocation16 + $0x50] sm:$0xf]
    %v1144 = vld [vmem:[#allocation16 + $0x54] sm:$0xf]
    %v1145 = vld [vmem:[#allocation16 + $0x58] sm:$0xf]
    %v1146 = vld [vmem:[#allocation16 + $0x5c] sm:$0xf]
    %v1147 = vld [vmem:[#allocation16 + $0x60] sm:$0xf]
    %v1148 = vld [vmem:[#allocation16 + $0x64] sm:$0xf]
    %v1149 = vld [vmem:[#allocation16 + $0x68] sm:$0xf]
    %v1150 = vld [vmem:[#allocation16 + $0x6c] sm:$0xf]
    %v1151 = vld [vmem:[#allocation16 + $0x70] sm:$0xf]
    %v1152 = vld [vmem:[#allocation16 + $0x74] sm:$0xf]
    %v1153 = vld [vmem:[#allocation16 + $0x78] sm:$0xf]
    %v1154 = vld [vmem:[#allocation16 + $0x7c] sm:$0xf]
    %v1155 = vld [vmem:[#allocation17] sm:$0x1]
    %v1157 = vlaneseq
    %v1158 = vshrl.u32 %v1157, 7
    %v1159 = vsub.s32 0, %v1158
    %v1160 = vrot.slane %v1155, %v1159
    %v1194 = vunpack.c.l.b16 %v1123
    %v1195 = vunpack.c.l.b16 %v1124
    %v1196 = vunpack.c.l.b16 %v1125
    %v1197 = vunpack.c.l.b16 %v1126
    %v1198 = vunpack.c.l.b16 %v1127
    %v1199 = vunpack.c.l.b16 %v1128
    %v1200 = vunpack.c.l.b16 %v1129
    %v1201 = vunpack.c.l.b16 %v1130
    %v1202 = vunpack.c.l.b16 %v1131
    %v1203 = vunpack.c.l.b16 %v1132
    %v1204 = vunpack.c.l.b16 %v1133
    %v1205 = vunpack.c.l.b16 %v1134
    %v1206 = vunpack.c.l.b16 %v1135
    %v1207 = vunpack.c.l.b16 %v1136
    %v1208 = vunpack.c.l.b16 %v1137
    %v1209 = vunpack.c.l.b16 %v1138
    %v1210 = vunpack.c.l.b16 %v1139
    %v1211 = vunpack.c.l.b16 %v1140
    %v1212 = vunpack.c.l.b16 %v1141
    %v1213 = vunpack.c.l.b16 %v1142
    %v1214 = vunpack.c.l.b16 %v1143
    %v1215 = vunpack.c.l.b16 %v1144
    %v1216 = vunpack.c.l.b16 %v1145
    %v1217 = vunpack.c.l.b16 %v1146
    %v1218 = vunpack.c.l.b16 %v1147
    %v1219 = vunpack.c.l.b16 %v1148
    %v1220 = vunpack.c.l.b16 %v1149
    %v1221 = vunpack.c.l.b16 %v1150
    %v1222 = vunpack.c.l.b16 %v1151
    %v1223 = vunpack.c.l.b16 %v1152
    %v1224 = vunpack.c.l.b16 %v1153
    %v1225 = vunpack.c.l.b16 %v1154
    %v1226 = vpack.c.b16 %v1195, %v1194
    %v1227 = vpack.c.b16 %v1197, %v1196
    %v1228 = vpack.c.b16 %v1199, %v1198
    %v1229 = vpack.c.b16 %v1201, %v1200
    %v1230 = vpack.c.b16 %v1203, %v1202
    %v1231 = vpack.c.b16 %v1205, %v1204
    %v1232 = vpack.c.b16 %v1207, %v1206
    %v1233 = vpack.c.b16 %v1209, %v1208
    %v1234 = vpack.c.b16 %v1211, %v1210
    %v1235 = vpack.c.b16 %v1213, %v1212
    %v1236 = vpack.c.b16 %v1215, %v1214
    %v1237 = vpack.c.b16 %v1217, %v1216
    %v1238 = vpack.c.b16 %v1219, %v1218
    %v1239 = vpack.c.b16 %v1221, %v1220
    %v1240 = vpack.c.b16 %v1223, %v1222
    %v1241 = vpack.c.b16 %v1225, %v1224
    %1258 = vmatprep.subr.bf16.mxu0 0
    %1259 = vmatpush1.bf16.msra.mxu0 %v1226
    %1260 = vmatprep.subr.bf16.mxu0 0
    %1261 = vmatpush1.bf16.msra.mxu0 %v1227
    %1262 = vmatprep.subr.bf16.mxu0 0
    %1263 = vmatpush1.bf16.msra.mxu0 %v1228
    %1264 = vmatprep.subr.bf16.mxu0 0
    %1265 = vmatpush1.bf16.msra.mxu0 %v1229
    %1266 = vmatprep.subr.bf16.mxu0 0
    %1267 = vmatpush1.bf16.msra.mxu0 %v1230
    %1268 = vmatprep.subr.bf16.mxu0 0
    %1269 = vmatpush1.bf16.msra.mxu0 %v1231
    %1270 = vmatprep.subr.bf16.mxu0 0
    %1271 = vmatpush1.bf16.msra.mxu0 %v1232
    %1272 = vmatprep.subr.bf16.mxu0 0
    %1273 = vmatpush1.bf16.msra.mxu0 %v1233
    %1274 = vmatprep.subr.bf16.mxu0 0
    %1275 = vmatpush1.bf16.msra.mxu0 %v1234
    %1276 = vmatprep.subr.bf16.mxu0 0
    %1277 = vmatpush1.bf16.msra.mxu0 %v1235
    %1278 = vmatprep.subr.bf16.mxu0 0
    %1279 = vmatpush1.bf16.msra.mxu0 %v1236
    %1280 = vmatprep.subr.bf16.mxu0 0
    %1281 = vmatpush1.bf16.msra.mxu0 %v1237
    %1282 = vmatprep.subr.bf16.mxu0 0
    %1283 = vmatpush1.bf16.msra.mxu0 %v1238
    %1284 = vmatprep.subr.bf16.mxu0 0
    %1285 = vmatpush1.bf16.msra.mxu0 %v1239
    %1286 = vmatprep.subr.bf16.mxu0 0
    %1287 = vmatpush1.bf16.msra.mxu0 %v1240
    %1288 = vmatprep.subr.bf16.mxu0 0
    %1289 = vmatpush1.bf16.msra.mxu0 %v1241
    %1290 = vmatprep.mubr.bf16.mxu0 %v1122
    %1291 = vmatmul.mubr.bf16.gmra.mrb[0].mxu0 %v1121
    %v1292 = vpop.f32.mrb[0].mxu0
    %v1293 = vadd.f32 %v1160, %v1292
    %v1294 = vpop.f32.mrb[0].mxu0
    %v1295 = vpop.f32.mrb[0].mxu0
    %v1296 = vpop.f32.mrb[0].mxu0
    %1297 = vdwg.mxu0
    %1298 = vst [vmem:[%s16] sm:$0xff] %v1293
    // Predicated region
    $region102: #{vae_classifier_forward.1} parent=1 // pred_check
      _
    $region103: #{vae_classifier_forward.1} parent=1 // pred_check_branch
      %1300 = sbr.rel (0) target = $region105
    $region104: #{vae_classifier_forward.1} parent=1 // pred_region
      %s1302 = ssub.s32 128, 128
      %1303 = vsyncadd [#allocation4], %s1302
      %s1305 = sshll.u32 [#allocation19], 4
      %s1306 = int_to_ptr.vmem [resolvable:$true] %s1305
      %1308 = dma.vmem_to_hbm [thread:$0]  %s1306, 128, %s15, [#allocation4]
    $region105: #{vae_classifier_forward.1} parent=1 // pred_fallthru
      _
    // Predicated region
    $region106: #{vae_classifier_forward.1} parent=1 // pred_check
      _
    $region107: #{vae_classifier_forward.1} parent=1 // pred_check_branch
      %1310 = sbr.rel (0) target = $region109
    $region108: #{vae_classifier_forward.1} parent=1 // pred_region
      _
    $region109: #{vae_classifier_forward.1} parent=1 // pred_fallthru
      _
    // Predicated region
    $region110: #{vae_classifier_forward.1} parent=1 // pred_check
      _
    $region111: #{vae_classifier_forward.1} parent=1 // pred_check_branch
      %1312 = sbr.rel (0) target = $region113
    $region112: #{vae_classifier_forward.1} parent=1 // pred_region
      %s1314 = ssub.s32 128, 128
      %1315 = vsyncadd [#allocation21], %s1314
      %s1317 = sshll.u32 [#allocation20], 4
      %s1318 = int_to_ptr.vmem [resolvable:$true] %s1317
      %1320 = dma.vmem_to_hbm [thread:$0]  %s1318, 128, %s17, [#allocation21]
    $region113: #{vae_classifier_forward.1} parent=1 // pred_fallthru
      _
    // Predicated region
    $region114: #{vae_classifier_forward.1} parent=1 // pred_check
      _
    $region115: #{vae_classifier_forward.1} parent=1 // pred_check_branch
      %1322 = sbr.rel (0) target = $region117
    $region116: #{vae_classifier_forward.1} parent=1 // pred_region
      %s1324 = ssub.s32 128, 128
      %1325 = vsyncadd [#allocation21], %s1324
      %s1327 = sshll.u32 [#allocation22], 4
      %s1328 = int_to_ptr.vmem [resolvable:$true] %s1327
      %1330 = dma.vmem_to_hbm [thread:$0]  %s1328, 128, %s18, [#allocation21]
    $region117: #{vae_classifier_forward.1} parent=1 // pred_fallthru
      _
    // Predicated region
    $region118: #{vae_classifier_forward.1} parent=1 // pred_check
      _
    $region119: #{vae_classifier_forward.1} parent=1 // pred_check_branch
      %1332 = sbr.rel (0) target = $region121
    $region120: #{vae_classifier_forward.1} parent=1 // pred_region
      %1333 = dma.done [#allocation4], 128
    $region121: #{vae_classifier_forward.1} parent=1 // pred_fallthru
      _
    // Predicated region
    $region122: #{vae_classifier_forward.1} parent=1 // pred_check
      _
    $region123: #{vae_classifier_forward.1} parent=1 // pred_check_branch
      %1335 = sbr.rel (0) target = $region125
    $region124: #{vae_classifier_forward.1} parent=1 // pred_region
      _
    $region125: #{vae_classifier_forward.1} parent=1 // pred_fallthru
      _
    // Predicated region
    $region126: #{vae_classifier_forward.1} parent=1 // pred_check
      _
    $region127: #{vae_classifier_forward.1} parent=1 // pred_check_branch
      %1337 = sbr.rel (0) target = $region129
    $region128: #{vae_classifier_forward.1} parent=1 // pred_region
      %1338 = dma.done [#allocation21], 128
    $region129: #{vae_classifier_forward.1} parent=1 // pred_fallthru
      _
    // Predicated region
    $region130: #{vae_classifier_forward.1} parent=1 // pred_check
      _
    $region131: #{vae_classifier_forward.1} parent=1 // pred_check_branch
      %1340 = sbr.rel (0) target = $region133
    $region132: #{vae_classifier_forward.1} parent=1 // pred_region
      %1341 = dma.done [#allocation21], 128
    $region133: #{vae_classifier_forward.1} parent=1 // pred_fallthru
      _
    %1342 = vsyncpa [#allocation3], 1
    %1343 = vsyncpa [#allocation6], 1
    %1344 = vsyncpa [#allocation9], 1
    %1345 = vsyncpa [#allocation12], 1
    %1346 = vsyncpa [#allocation15], 1
    %1347 = vsyncpa [#allocation18], 1
    %1348 = vsyncpa [#allocation4], 1
    %1349 = vsyncpa [#allocation21], 1

</llo_original>
